<compile_context>
chip_gen: v7x
topology: tpu7x:2x2x1
jax: 0.10.0
libtpu: 0.0.40
codegen_flags: <defaults>
</compile_context>

<pallas_src>
import functools

import jax
import jax.numpy as jnp
from jax import lax
from jax.experimental import pallas as pl
from jax.experimental.pallas import tpu as pltpu


def _round_up(n, m):
    return -(-n // m) * m


def _padded_layer_norm(xp, gamma_p, beta_p, d_real, eps=1e-5):
    """LayerNorm over the first `d_real` lanes of a 128-lane-padded tensor.

    `xp` has exact zeros in lanes >= d_real, so sum(xp)/d_real and
    sum(xp*xp)/d_real are the true first/second moments — no mask needed.
    gamma_p/beta_p are zero in the padded lanes, so the output keeps exact
    zeros there as well.
    """
    inv_d = 1.0 / d_real
    mean = jnp.sum(xp, axis=-1, keepdims=True) * inv_d
    var = jnp.maximum(
        jnp.sum(xp * xp, axis=-1, keepdims=True) * inv_d - mean * mean, 0.0)
    return (xp - mean) * lax.rsqrt(var + eps) * gamma_p + beta_p


def mft_kernel(gnn_ref, tab_ref, p_ref, out_ref, *, f1, C, eps=1e-5):
    """Fused encoder stand-in + MLP head, one batch tile per grid step."""
    D = 2 * f1
    a1 = _round_up(f1, 8)

    # -- static row offsets into the packed parameter buffer ------------------
    r_w1a = 0                  # (f1, C)  rows of  W1 = I + Wv@Wo  (gnn half)
    r_w1b = a1                 # (f1, C)  rows of  W1               (tab half)
    r_wff1 = 2 * a1            # (C, C)   FFN up   (real block [0:D, 0:4D])
    r_wff2 = r_wff1 + C        # (C, C)   FFN down (real block [0:4D, 0:D])
    r_wf1 = r_wff2 + C         # (C, C)   self.f1  (real [0:D, 0:D])
    r_wf2 = r_wf1 + C          # (C, C)   self.f2  (real [0:D, 0:D])
    r_wf3 = r_wf2 + C          # (C, C)   self.f3  (real [0:D, 0:2])
    r_vec = r_wf3 + C          # (16, C)  bias / gamma table

    vecs = p_ref[r_vec:r_vec + 16, :]          # (16, C), tiny — stays in vregs
    bvo, g1, b1 = vecs[0:1], vecs[1:2], vecs[2:3]
    bff1, bff2 = vecs[3:4], vecs[4:5]
    g2, b2 = vecs[5:6], vecs[6:7]
    bf1, bf2, bf3 = vecs[7:8], vecs[8:9], vecs[9:10]

    def dot(a, b):
        return jnp.dot(a, b, preferred_element_type=jnp.float32)

    gnn = gnn_ref[...].astype(jnp.float32)     # (TB, f1)
    tab = tab_ref[...].astype(jnp.float32)     # (TB, f1)

    # --- TransformerEncoder stand-in (seq_len == 1 ⇒ attention is linear) ---
    # x + attn(x) == x @ (I + Wv@Wo) + (bv@Wo + bo), split over the two halves
    # of x so the concatenated activation never has to be materialized.
    pre1 = (dot(gnn, p_ref[r_w1a:r_w1a + f1, :])
            + dot(tab, p_ref[r_w1b:r_w1b + f1, :]) + bvo)        # (TB, C)
    h = _padded_layer_norm(pre1, g1, b1, D, eps)

    ff = jnp.maximum(dot(h, p_ref[r_wff1:r_wff1 + C, :]) + bff1, 0.0)
    ff = dot(ff, p_ref[r_wff2:r_wff2 + C, :]) + bff2
    h = _padded_layer_norm(h + ff, g2, b2, D, eps)

    # --- MLP head: f1 -> drop(id) -> relu -> f2 -> drop(id) -> relu -> f3 ---
    h = jnp.maximum(dot(h, p_ref[r_wf1:r_wf1 + C, :]) + bf1, 0.0)
    h = jnp.maximum(dot(h, p_ref[r_wf2:r_wf2 + C, :]) + bf2, 0.0)
    out = dot(h, p_ref[r_wf3:r_wf3 + C, :]) + bf3                # (TB, C)

    out_ref[...] = out.astype(out_ref.dtype)   # lane-dense unmasked store


# ----------------------------------------------------------------------------
# Parameter handling
# ----------------------------------------------------------------------------
def init_params(key, f1):
    """Deterministic parameter init (shapes implied by the torch module)."""
    d = 2 * f1
    dff = 4 * d

    def w(k, shape, scale=0.02):
        return (scale * jax.random.normal(k, shape)).astype(jnp.float32)

    ks = jax.random.split(key, 8)
    return dict(
        # encoder stand-in
        wv=w(ks[0], (d, d)), bv=jnp.zeros((1, d), jnp.float32),
        wo=w(ks[1], (d, d)), bo=jnp.zeros((1, d), jnp.float32),
        g1=jnp.ones((1, d), jnp.float32), b1=jnp.zeros((1, d), jnp.float32),
        wff1=w(ks[2], (d, dff)), bff1=jnp.zeros((1, dff), jnp.float32),
        wff2=w(ks[3], (dff, d)), bff2=jnp.zeros((1, d), jnp.float32),
        g2=jnp.ones((1, d), jnp.float32), b2=jnp.zeros((1, d), jnp.float32),
        # head
        wf1=w(ks[4], (d, d)), bf1=jnp.zeros((1, d), jnp.float32),
        wf2=w(ks[5], (d, d)), bf2=jnp.zeros((1, d), jnp.float32),
        wf3=w(ks[6], (d, 2)), bf3=jnp.zeros((1, 2), jnp.float32),
    )


def _packed_dims(f1):
    D = 2 * f1
    dff = 4 * D
    C = max(_round_up(dff, 128), 128)
    a1 = _round_up(f1, 8)
    R = 2 * a1 + 5 * C + 16
    return D, dff, C, a1, R


def pack_params(params, f1):
    """Fuse the linear attention + residual offline and pack everything into a
    single zero-padded (R, C) buffer matching the kernel's static layout."""
    D, dff, C, a1, R = _packed_dims(f1)

    wvo = params["wv"] @ params["wo"]                     # fuse V/O projections
    w1 = jnp.eye(D, dtype=jnp.float32) + wvo              # fold residual add
    bvo = params["bv"] @ params["wo"] + params["bo"]      # (1, D)

    buf = jnp.zeros((R, C), jnp.float32)

    def put(b, row, mat):
        rr, cc = mat.shape
        return b.at[row:row + rr, 0:cc].set(mat.astype(jnp.float32))

    buf = put(buf, 0, w1[:f1])          # gnn half of W1
    buf = put(buf, a1, w1[f1:])         # tabular half of W1
    r = 2 * a1
    buf = put(buf, r, params["wff1"]); r += C
    buf = put(buf, r, params["wff2"]); r += C
    buf = put(buf, r, params["wf1"]);  r += C
    buf = put(buf, r, params["wf2"]);  r += C
    buf = put(buf, r, params["wf3"]);  r += C
    vec_rows = (bvo, params["g1"], params["b1"], params["bff1"],
                params["bff2"], params["g2"], params["b2"],
                params["bf1"], params["bf2"], params["bf3"])
    for k, v in enumerate(vec_rows):
        buf = put(buf, r + k, v)
    return buf


# ----------------------------------------------------------------------------
# Forward
# ----------------------------------------------------------------------------
@functools.partial(jax.jit, static_argnames=("f1", "block_b"))
def mft_forward(gnn_x, tabular_x, packed_params, *, f1, block_b=512):
    """Pallas equivalent of mft.forward after the (untranslatable) submodules.

    Returns (B, 1, 2) to match the torch output shape (unsqueeze(1) kept).
    """
    B = gnn_x.shape[0]
    D, dff, C, a1, R = _packed_dims(f1)
    assert packed_params.shape == (R, C)

    TB = min(block_b, _round_up(B, 8))        # batch tile
    nb = pl.cdiv(B, TB)

    kernel = functools.partial(mft_kernel, f1=f1, C=C)

    out_padded = pl.pallas_call(
        kernel,
        out_shape=jax.ShapeDtypeStruct((B, C), jnp.float32),
        grid=(nb,),
        in_specs=[
            pl.BlockSpec((TB, f1), lambda i: (i, 0)),     # gnn branch tile
            pl.BlockSpec((TB, f1), lambda i: (i, 0)),     # tabular branch tile
            pl.BlockSpec((R, C), lambda i: (0, 0)),       # resident packed params
        ],
        out_specs=pl.BlockSpec((TB, C), lambda i: (i, 0)),
        compiler_params=pltpu.CompilerParams(
            dimension_semantics=("parallel",)),           # megacore on v7x
    )(gnn_x, tabular_x, packed_params)

    # only the first 2 lanes are real; torch keeps the seq axis -> (B, 1, 2)
    return out_padded[:, None, 0:2]


# ----------------------------------------------------------------------------
# Pure-JAX reference (same stand-in semantics) for a correctness check
# ----------------------------------------------------------------------------
def _ln_ref(x, gamma, beta, eps=1e-5):
    mean = jnp.mean(x, axis=-1, keepdims=True)
    var = jnp.mean((x - mean) ** 2, axis=-1, keepdims=True)
    return (x - mean) * lax.rsqrt(var + eps) * gamma + beta


def mft_reference(gnn_x, tabular_x, p):
    x = jnp.concatenate([gnn_x, tabular_x], axis=1)
    v = x @ p["wv"] + p["bv"]
    attn = v @ p["wo"] + p["bo"]
    h = _ln_ref(x + attn, p["g1"], p["b1"])
    ff = jnp.maximum(h @ p["wff1"] + p["bff1"], 0.0)
    ff = ff @ p["wff2"] + p["bff2"]
    h = _ln_ref(h + ff, p["g2"], p["b2"])
    h = jnp.maximum(h @ p["wf1"] + p["bf1"], 0.0)
    h = jnp.maximum(h @ p["wf2"] + p["bf2"], 0.0)
    out = h @ p["wf3"] + p["bf3"]
    return out[:, None, :]


if __name__ == "__main__":
    f1 = 16          # feature width of each branch -> hidden = 2*f1 = 32
    batch = 64

    key = jax.random.PRNGKey(0)
    k_gnn, k_tab, k_par = jax.random.split(key, 3)

    gnn_x = jax.random.normal(k_gnn, (batch, f1), dtype=jnp.float32)
    tabular_x = jax.random.normal(k_tab, (batch, f1), dtype=jnp.float32)
    params = init_params(k_par, f1)
    packed = pack_params(params, f1)          # one-time offline fuse + pack

    out = mft_forward(gnn_x, tabular_x, packed, f1=f1)
    out = jax.block_until_ready(out)

    assert out.shape == (batch, 1, 2), out.shape
    assert bool(jnp.all(jnp.isfinite(out)))

    ref = jax.block_until_ready(mft_reference(gnn_x, tabular_x, params))
    assert bool(jnp.allclose(out, ref, rtol=1e-3, atol=1e-3)), (
        float(jnp.max(jnp.abs(out - ref))))

    print("KERNEL_OK")
</pallas_src>

<mosaic_0001>
module attributes {stable_mosaic.version = 11 : i64} {
  func.func @mft_kernel(%arg0: i32, %arg1: memref<64x16xf32, #tpu.memory_space<vmem>>, %arg2: memref<64x16xf32, #tpu.memory_space<vmem>>, %arg3: memref<688x128xf32, #tpu.memory_space<vmem>>, %arg4: memref<64x128xf32, #tpu.memory_space<vmem>>) attributes {dimension_semantics = [#tpu.dimension_semantics<parallel>], iteration_bounds = array<i64: 1>, scalar_prefetch = 0 : i64, scratch_operands = 0 : i64, tpu.core_type = #tpu.core_type<tc>, window_params = [{transform_indices = @transform_0, window_bounds = array<i64: 64, 16>}, {transform_indices = @transform_1, window_bounds = array<i64: 64, 16>}, {pipeline_mode = #tpu.pipeline_mode<synchronous>, transform_indices = @transform_2, window_bounds = array<i64: 688, 128>}, {transform_indices = @transform_3, window_bounds = array<i64: 64, 128>}]} {
    %c672 = arith.constant 672 : index
    %c0 = arith.constant 0 : index
    %0 = vector.load %arg3[%c672, %c0] : memref<688x128xf32, #tpu.memory_space<vmem>>, vector<16x128xf32>
    %1 = vector.extract_strided_slice %0 {offsets = [0, 0], sizes = [1, 128], strides = [1, 1]} : vector<16x128xf32> to vector<1x128xf32>
    %2 = vector.extract_strided_slice %0 {offsets = [1, 0], sizes = [1, 128], strides = [1, 1]} : vector<16x128xf32> to vector<1x128xf32>
    %3 = vector.extract_strided_slice %0 {offsets = [2, 0], sizes = [1, 128], strides = [1, 1]} : vector<16x128xf32> to vector<1x128xf32>
    %4 = vector.extract_strided_slice %0 {offsets = [3, 0], sizes = [1, 128], strides = [1, 1]} : vector<16x128xf32> to vector<1x128xf32>
    %5 = vector.extract_strided_slice %0 {offsets = [4, 0], sizes = [1, 128], strides = [1, 1]} : vector<16x128xf32> to vector<1x128xf32>
    %6 = vector.extract_strided_slice %0 {offsets = [5, 0], sizes = [1, 128], strides = [1, 1]} : vector<16x128xf32> to vector<1x128xf32>
    %7 = vector.extract_strided_slice %0 {offsets = [6, 0], sizes = [1, 128], strides = [1, 1]} : vector<16x128xf32> to vector<1x128xf32>
    %8 = vector.extract_strided_slice %0 {offsets = [7, 0], sizes = [1, 128], strides = [1, 1]} : vector<16x128xf32> to vector<1x128xf32>
    %9 = vector.extract_strided_slice %0 {offsets = [8, 0], sizes = [1, 128], strides = [1, 1]} : vector<16x128xf32> to vector<1x128xf32>
    %10 = vector.extract_strided_slice %0 {offsets = [9, 0], sizes = [1, 128], strides = [1, 1]} : vector<16x128xf32> to vector<1x128xf32>
    %c0_0 = arith.constant 0 : index
    %c0_1 = arith.constant 0 : index
    %11 = vector.load %arg1[%c0_0, %c0_1] : memref<64x16xf32, #tpu.memory_space<vmem>>, vector<64x16xf32>
    %c0_2 = arith.constant 0 : index
    %c0_3 = arith.constant 0 : index
    %12 = vector.load %arg2[%c0_2, %c0_3] : memref<64x16xf32, #tpu.memory_space<vmem>>, vector<64x16xf32>
    %c0_4 = arith.constant 0 : index
    %c0_5 = arith.constant 0 : index
    %13 = vector.load %arg3[%c0_4, %c0_5] : memref<688x128xf32, #tpu.memory_space<vmem>>, vector<16x128xf32>
    %cst = arith.constant dense<0.000000e+00> : vector<64x128xf32>
    %14 = tpu.matmul %11, %13, %cst {dimension_numbers = #tpu.dot_dimension_numbers<[1], [0], [0], [1], [0, 0, 1, 1], [], []>} : vector<64x16xf32>, vector<16x128xf32>, vector<64x128xf32> -> vector<64x128xf32>
    %c16 = arith.constant 16 : index
    %c0_6 = arith.constant 0 : index
    %15 = vector.load %arg3[%c16, %c0_6] : memref<688x128xf32, #tpu.memory_space<vmem>>, vector<16x128xf32>
    %cst_7 = arith.constant dense<0.000000e+00> : vector<64x128xf32>
    %16 = tpu.matmul %12, %15, %cst_7 {dimension_numbers = #tpu.dot_dimension_numbers<[1], [0], [0], [1], [0, 0, 1, 1], [], []>} : vector<64x16xf32>, vector<16x128xf32>, vector<64x128xf32> -> vector<64x128xf32>
    %17 = arith.addf %14, %16 : vector<64x128xf32>
    %18 = vector.broadcast %1 : vector<1x128xf32> to vector<64x128xf32>
    %19 = arith.addf %17, %18 : vector<64x128xf32>
    %cst_8 = arith.constant dense<0.000000e+00> : vector<64xf32>
    %20 = vector.multi_reduction <add>, %19, %cst_8 [1] : vector<64x128xf32> to vector<64xf32>
    %21 = vector.shape_cast %20 : vector<64xf32> to vector<64x1xf32>
    %cst_9 = arith.constant 3.125000e-02 : f32
    %22 = vector.broadcast %cst_9 : f32 to vector<64x1xf32>
    %23 = arith.mulf %21, %22 : vector<64x1xf32>
    %24 = arith.mulf %19, %19 : vector<64x128xf32>
    %cst_10 = arith.constant dense<0.000000e+00> : vector<64xf32>
    %25 = vector.multi_reduction <add>, %24, %cst_10 [1] : vector<64x128xf32> to vector<64xf32>
    %26 = vector.shape_cast %25 : vector<64xf32> to vector<64x1xf32>
    %cst_11 = arith.constant 3.125000e-02 : f32
    %27 = vector.broadcast %cst_11 : f32 to vector<64x1xf32>
    %28 = arith.mulf %26, %27 : vector<64x1xf32>
    %29 = arith.mulf %23, %23 : vector<64x1xf32>
    %30 = arith.subf %28, %29 : vector<64x1xf32>
    %cst_12 = arith.constant 0.000000e+00 : f32
    %31 = vector.broadcast %cst_12 : f32 to vector<64x1xf32>
    %32 = arith.maximumf %30, %31 : vector<64x1xf32>
    %33 = vector.broadcast %23 : vector<64x1xf32> to vector<64x128xf32>
    %34 = arith.subf %19, %33 : vector<64x128xf32>
    %cst_13 = arith.constant 9.99999974E-6 : f32
    %35 = vector.broadcast %cst_13 : f32 to vector<64x1xf32>
    %36 = arith.addf %32, %35 : vector<64x1xf32>
    %37 = math.rsqrt %36 : vector<64x1xf32>
    %38 = vector.broadcast %37 : vector<64x1xf32> to vector<64x128xf32>
    %39 = arith.mulf %34, %38 : vector<64x128xf32>
    %40 = vector.broadcast %2 : vector<1x128xf32> to vector<64x128xf32>
    %41 = arith.mulf %39, %40 : vector<64x128xf32>
    %42 = vector.broadcast %3 : vector<1x128xf32> to vector<64x128xf32>
    %43 = arith.addf %41, %42 : vector<64x128xf32>
    %c32 = arith.constant 32 : index
    %c0_14 = arith.constant 0 : index
    %44 = vector.load %arg3[%c32, %c0_14] : memref<688x128xf32, #tpu.memory_space<vmem>>, vector<128x128xf32>
    %cst_15 = arith.constant dense<0.000000e+00> : vector<64x128xf32>
    %45 = tpu.matmul %43, %44, %cst_15 {dimension_numbers = #tpu.dot_dimension_numbers<[1], [0], [0], [1], [0, 0, 1, 1], [], []>} : vector<64x128xf32>, vector<128x128xf32>, vector<64x128xf32> -> vector<64x128xf32>
    %46 = vector.broadcast %4 : vector<1x128xf32> to vector<64x128xf32>
    %47 = arith.addf %45, %46 : vector<64x128xf32>
    %cst_16 = arith.constant 0.000000e+00 : f32
    %48 = vector.broadcast %cst_16 : f32 to vector<64x128xf32>
    %49 = arith.maximumf %47, %48 : vector<64x128xf32>
    %c160 = arith.constant 160 : index
    %c0_17 = arith.constant 0 : index
    %50 = vector.load %arg3[%c160, %c0_17] : memref<688x128xf32, #tpu.memory_space<vmem>>, vector<128x128xf32>
    %cst_18 = arith.constant dense<0.000000e+00> : vector<64x128xf32>
    %51 = tpu.matmul %49, %50, %cst_18 {dimension_numbers = #tpu.dot_dimension_numbers<[1], [0], [0], [1], [0, 0, 1, 1], [], []>} : vector<64x128xf32>, vector<128x128xf32>, vector<64x128xf32> -> vector<64x128xf32>
    %52 = vector.broadcast %5 : vector<1x128xf32> to vector<64x128xf32>
    %53 = arith.addf %51, %52 : vector<64x128xf32>
    %54 = arith.addf %43, %53 : vector<64x128xf32>
    %cst_19 = arith.constant dense<0.000000e+00> : vector<64xf32>
    %55 = vector.multi_reduction <add>, %54, %cst_19 [1] : vector<64x128xf32> to vector<64xf32>
    %56 = vector.shape_cast %55 : vector<64xf32> to vector<64x1xf32>
    %cst_20 = arith.constant 3.125000e-02 : f32
    %57 = vector.broadcast %cst_20 : f32 to vector<64x1xf32>
    %58 = arith.mulf %56, %57 : vector<64x1xf32>
    %59 = arith.mulf %54, %54 : vector<64x128xf32>
    %cst_21 = arith.constant dense<0.000000e+00> : vector<64xf32>
    %60 = vector.multi_reduction <add>, %59, %cst_21 [1] : vector<64x128xf32> to vector<64xf32>
    %61 = vector.shape_cast %60 : vector<64xf32> to vector<64x1xf32>
    %cst_22 = arith.constant 3.125000e-02 : f32
    %62 = vector.broadcast %cst_22 : f32 to vector<64x1xf32>
    %63 = arith.mulf %61, %62 : vector<64x1xf32>
    %64 = arith.mulf %58, %58 : vector<64x1xf32>
    %65 = arith.subf %63, %64 : vector<64x1xf32>
    %cst_23 = arith.constant 0.000000e+00 : f32
    %66 = vector.broadcast %cst_23 : f32 to vector<64x1xf32>
    %67 = arith.maximumf %65, %66 : vector<64x1xf32>
    %68 = vector.broadcast %58 : vector<64x1xf32> to vector<64x128xf32>
    %69 = arith.subf %54, %68 : vector<64x128xf32>
    %cst_24 = arith.constant 9.99999974E-6 : f32
    %70 = vector.broadcast %cst_24 : f32 to vector<64x1xf32>
    %71 = arith.addf %67, %70 : vector<64x1xf32>
    %72 = math.rsqrt %71 : vector<64x1xf32>
    %73 = vector.broadcast %72 : vector<64x1xf32> to vector<64x128xf32>
    %74 = arith.mulf %69, %73 : vector<64x128xf32>
    %75 = vector.broadcast %6 : vector<1x128xf32> to vector<64x128xf32>
    %76 = arith.mulf %74, %75 : vector<64x128xf32>
    %77 = vector.broadcast %7 : vector<1x128xf32> to vector<64x128xf32>
    %78 = arith.addf %76, %77 : vector<64x128xf32>
    %c288 = arith.constant 288 : index
    %c0_25 = arith.constant 0 : index
    %79 = vector.load %arg3[%c288, %c0_25] : memref<688x128xf32, #tpu.memory_space<vmem>>, vector<128x128xf32>
    %cst_26 = arith.constant dense<0.000000e+00> : vector<64x128xf32>
    %80 = tpu.matmul %78, %79, %cst_26 {dimension_numbers = #tpu.dot_dimension_numbers<[1], [0], [0], [1], [0, 0, 1, 1], [], []>} : vector<64x128xf32>, vector<128x128xf32>, vector<64x128xf32> -> vector<64x128xf32>
    %81 = vector.broadcast %8 : vector<1x128xf32> to vector<64x128xf32>
    %82 = arith.addf %80, %81 : vector<64x128xf32>
    %cst_27 = arith.constant 0.000000e+00 : f32
    %83 = vector.broadcast %cst_27 : f32 to vector<64x128xf32>
    %84 = arith.maximumf %82, %83 : vector<64x128xf32>
    %c416 = arith.constant 416 : index
    %c0_28 = arith.constant 0 : index
    %85 = vector.load %arg3[%c416, %c0_28] : memref<688x128xf32, #tpu.memory_space<vmem>>, vector<128x128xf32>
    %cst_29 = arith.constant dense<0.000000e+00> : vector<64x128xf32>
    %86 = tpu.matmul %84, %85, %cst_29 {dimension_numbers = #tpu.dot_dimension_numbers<[1], [0], [0], [1], [0, 0, 1, 1], [], []>} : vector<64x128xf32>, vector<128x128xf32>, vector<64x128xf32> -> vector<64x128xf32>
    %87 = vector.broadcast %9 : vector<1x128xf32> to vector<64x128xf32>
    %88 = arith.addf %86, %87 : vector<64x128xf32>
    %cst_30 = arith.constant 0.000000e+00 : f32
    %89 = vector.broadcast %cst_30 : f32 to vector<64x128xf32>
    %90 = arith.maximumf %88, %89 : vector<64x128xf32>
    %c544 = arith.constant 544 : index
    %c0_31 = arith.constant 0 : index
    %91 = vector.load %arg3[%c544, %c0_31] : memref<688x128xf32, #tpu.memory_space<vmem>>, vector<128x128xf32>
    %cst_32 = arith.constant dense<0.000000e+00> : vector<64x128xf32>
    %92 = tpu.matmul %90, %91, %cst_32 {dimension_numbers = #tpu.dot_dimension_numbers<[1], [0], [0], [1], [0, 0, 1, 1], [], []>} : vector<64x128xf32>, vector<128x128xf32>, vector<64x128xf32> -> vector<64x128xf32>
    %93 = vector.broadcast %10 : vector<1x128xf32> to vector<64x128xf32>
    %94 = arith.addf %92, %93 : vector<64x128xf32>
    %c0_33 = arith.constant 0 : index
    %c0_34 = arith.constant 0 : index
    %95 = vector.load %arg4[%c0_33, %c0_34] : memref<64x128xf32, #tpu.memory_space<vmem>>, vector<64x128xf32>
    tpu.vector_store %arg4[%c0_33, %c0_34], %94 {strides = array<i32>} : memref<64x128xf32, #tpu.memory_space<vmem>>, vector<64x128xf32>,
    return
  }
  func.func @transform_0(%arg0: i32) -> (i32, i32) {
    %c0_i32 = arith.constant 0 : i32
    %c0_i32_0 = arith.constant 0 : i32
    return %arg0, %c0_i32 : i32, i32
  }
  func.func @transform_1(%arg0: i32) -> (i32, i32) {
    %c0_i32 = arith.constant 0 : i32
    %c0_i32_0 = arith.constant 0 : i32
    return %arg0, %c0_i32 : i32, i32
  }
  func.func @transform_2(%arg0: i32) -> (i32, i32) {
    %c0_i32 = arith.constant 0 : i32
    %c0_i32_0 = arith.constant 0 : i32
    %c0_i32_1 = arith.constant 0 : i32
    return %c0_i32, %c0_i32_0 : i32, i32
  }
  func.func @transform_3(%arg0: i32) -> (i32, i32) {
    %c0_i32 = arith.constant 0 : i32
    %c0_i32_0 = arith.constant 0 : i32
    return %arg0, %c0_i32 : i32, i32
  }
}

</mosaic_0001>

<llo_original>
// kernel: mft_forward.1
$region0: #{mft_forward.1}
  #allocation0 [shape = 'u32[]', space=smem, size = 0x4, offset = 0x4, fixed_abs, tag = 'smem constant byte address 0x4 - core index']
  #allocation1 [shape = 'u32[144,128]{1,0:T(1,128)}', space=vmem, size = 0x12000, scoped, tag = 'internal scratch']
  %s0 = inlined_call_operand.vmem [shape: f32[64,16], index: 0, kind: input, shape index: {}]
  %s1 = inlined_call_operand.vmem [shape: f32[64,16], index: 1, kind: input, shape index: {}]
  %s2 = inlined_call_operand.hbm [shape: f32[688,128], index: 2, kind: input, shape index: {}]
  %s3 = inlined_call_operand.vmem [shape: f32[64,128], index: 3, kind: output, shape index: {}]
  %s4 = sld [smem:[#allocation0]]
  $region26: #{mft_forward.1} parent=0
    _
  %s6 = ssub.s32 1, %s4
  %s7 = scalar_select 0, %s6, %s4
  $region1: #{mft_forward.1} parent=0
    #allocation2 [shape = 'u8[352256]{0}', space=vmem, size = 0x56000, scoped, tag = 'input window, operand 2, single buffered']
    #allocation3 [shape = 's32[1]{0}', space=sflag, size = 0x4, scoped, tag = 'scoped memory for mft_forward.1']
    %8 = vsyncpa [#allocation3], 0
    // Predicated region
    $region2: #{mft_forward.1} parent=1 // pred_check
      _
    $region3: #{mft_forward.1} parent=1 // pred_check_branch
      %10 = sbr.rel (0) target = $region5
    $region4: #{mft_forward.1} parent=1 // pred_region
      _
    $region5: #{mft_forward.1} parent=1 // pred_fallthru
      _
    // Predicated region
    $region6: #{mft_forward.1} parent=1 // pred_check
      _
    $region7: #{mft_forward.1} parent=1 // pred_check_branch
      %12 = sbr.rel (0) target = $region9
    $region8: #{mft_forward.1} parent=1 // pred_region
      _
    $region9: #{mft_forward.1} parent=1 // pred_fallthru
      _
    // Predicated region
    $region10: #{mft_forward.1} parent=1 // pred_check
      _
    $region11: #{mft_forward.1} parent=1 // pred_check_branch
      %14 = sbr.rel (0) target = $region13
    $region12: #{mft_forward.1} parent=1 // pred_region
      %s16 = ssub.s32 11008, 11008
      %17 = vsyncadd [#allocation3], %s16
      %s18 = sshll.u32 [#allocation2], 4
      %s19 = int_to_ptr.vmem [resolvable:$true] %s18
      %24 = dma.hbm_to_vmem [thread:$0]  %s2, 11008, %s19, [#allocation3], 128, 128, 8
    $region13: #{mft_forward.1} parent=1 // pred_fallthru
      _
    // Predicated region
    $region14: #{mft_forward.1} parent=1 // pred_check
      _
    $region15: #{mft_forward.1} parent=1 // pred_check_branch
      %26 = sbr.rel (0) target = $region17
    $region16: #{mft_forward.1} parent=1 // pred_region
      %27 = dma.done [#allocation3], 11008
    $region17: #{mft_forward.1} parent=1 // pred_fallthru
      _
    %v28 = vld [vmem:[#allocation2 + $0x2a0] sm:$0xff]
    %v29 = vld [vmem:[#allocation2 + $0x2a8] sm:$0xff]
    %v30 = vld [vmem:[%s0] sm:$0xff]
    %v31 = vld [vmem:[%s0 + $0x8] sm:$0xff]
    %v32 = vld [vmem:[%s0 + $0x10] sm:$0xff]
    %v33 = vld [vmem:[%s0 + $0x18] sm:$0xff]
    %v34 = vld [vmem:[%s0 + $0x20] sm:$0xff]
    %v35 = vld [vmem:[%s0 + $0x28] sm:$0xff]
    %v36 = vld [vmem:[%s0 + $0x30] sm:$0xff]
    %v37 = vld [vmem:[%s0 + $0x38] sm:$0xff]
    %v38 = vld [vmem:[%s1] sm:$0xff]
    %v39 = vld [vmem:[%s1 + $0x8] sm:$0xff]
    %v40 = vld [vmem:[%s1 + $0x10] sm:$0xff]
    %v41 = vld [vmem:[%s1 + $0x18] sm:$0xff]
    %v42 = vld [vmem:[%s1 + $0x20] sm:$0xff]
    %v43 = vld [vmem:[%s1 + $0x28] sm:$0xff]
    %v44 = vld [vmem:[%s1 + $0x30] sm:$0xff]
    %v45 = vld [vmem:[%s1 + $0x38] sm:$0xff]
    %v46 = vld [vmem:[#allocation2] sm:$0xff]
    %v47 = vld [vmem:[#allocation2 + $0x8] sm:$0xff]
    %v48 = vld [vmem:[#allocation2 + $0x10] sm:$0xff]
    %v49 = vld [vmem:[#allocation2 + $0x18] sm:$0xff]
    %vm50 = vcmask 130048
    %v52 = vsel %vm50, %v38, 0
    %v55 = vsel %vm50, %v39, 0
    %v58 = vsel %vm50, %v40, 0
    %v61 = vsel %vm50, %v41, 0
    %v64 = vsel %vm50, %v42, 0
    %v67 = vsel %vm50, %v43, 0
    %v70 = vsel %vm50, %v44, 0
    %v73 = vsel %vm50, %v45, 0
    %75 = vmatprep.subr.mxu0 0.0
    %76 = vmatpush1.msra.mxu0 %v48
    %77 = vmatprep.subr.mxu0 0.0
    %78 = vmatpush1.msra.mxu0 %v49
    %79 = vmatprep.subr.mxu0 0.0
    %80 = vmatpush1.msra.mxu0 0.0
    %81 = vmatprep.subr.mxu0 0.0
    %82 = vmatpush1.msra.mxu0 0.0
    %83 = vmatprep.subr.mxu0 0.0
    %84 = vmatpush1.msra.mxu0 0.0
    %85 = vmatprep.subr.mxu0 0.0
    %86 = vmatpush1.msra.mxu0 0.0
    %87 = vmatprep.subr.mxu0 0.0
    %88 = vmatpush1.msra.mxu0 0.0
    %89 = vmatprep.subr.mxu0 0.0
    %90 = vmatpush1.msra.mxu0 0.0
    %91 = vmatprep.subr.mxu0 0.0
    %92 = vmatpush1.msra.mxu0 0.0
    %93 = vmatprep.subr.mxu0 0.0
    %94 = vmatpush1.msra.mxu0 0.0
    %95 = vmatprep.subr.mxu0 0.0
    %96 = vmatpush1.msra.mxu0 0.0
    %97 = vmatprep.subr.mxu0 0.0
    %98 = vmatpush1.msra.mxu0 0.0
    %99 = vmatprep.subr.mxu0 0.0
    %100 = vmatpush1.msra.mxu0 0.0
    %101 = vmatprep.subr.mxu0 0.0
    %102 = vmatpush1.msra.mxu0 0.0
    %103 = vmatprep.subr.mxu0 0.0
    %104 = vmatpush1.msra.mxu0 0.0
    %105 = vmatprep.subr.mxu0 0.0
    %106 = vmatpush1.msra.mxu0 0.0
    %107 = vmatprep.subr.mxu0 0.0
    %108 = vmatpush1.msra.mxu0 0.0
    %109 = vmatprep.subr.mxu0 0.0
    %110 = vmatpush1.msra.mxu0 0.0
    %111 = vmatprep.subr.mxu0 0.0
    %112 = vmatpush1.msra.mxu0 0.0
    %113 = vmatprep.subr.mxu0 0.0
    %114 = vmatpush1.msra.mxu0 0.0
    %115 = vmatprep.subr.mxu0 0.0
    %116 = vmatpush1.msra.mxu0 0.0
    %117 = vmatprep.subr.mxu0 0.0
    %118 = vmatpush1.msra.mxu0 0.0
    %119 = vmatprep.subr.mxu0 0.0
    %120 = vmatpush1.msra.mxu0 0.0
    %121 = vmatprep.subr.mxu0 0.0
    %122 = vmatpush1.msra.mxu0 0.0
    %123 = vmatprep.subr.mxu0 0.0
    %124 = vmatpush1.msra.mxu0 0.0
    %125 = vmatprep.subr.mxu0 0.0
    %126 = vmatpush1.msra.mxu0 0.0
    %127 = vmatprep.subr.mxu0 0.0
    %128 = vmatpush1.msra.mxu0 0.0
    %129 = vmatprep.subr.mxu0 0.0
    %130 = vmatpush1.msra.mxu0 0.0
    %131 = vmatprep.subr.mxu0 0.0
    %132 = vmatpush1.msra.mxu0 0.0
    %133 = vmatprep.subr.mxu0 0.0
    %134 = vmatpush1.msra.mxu0 0.0
    %135 = vmatprep.subr.mxu0 0.0
    %136 = vmatpush1.msra.mxu0 0.0
    %137 = vmatprep.subr.mxu0 0.0
    %138 = vmatpush1.msra.mxu0 0.0
    %139 = vmatprep.mubr.f32.mxu0 0.0
    %140 = vmatmul.mubr.f32.gmra.mrb[0].mxu0 %v52
    %v141 = vpop.f32.mrb[0].mxu0
    %v142 = vadd.f32 0.0, %v141
    %v143 = vpop.f32.mrb[0].mxu0
    %144 = vmatprep.mubr.f32.mxu0 0.0
    %145 = vmatmul.mubr.f32.gmra.mrb[0].mxu0 %v55
    %v146 = vpop.f32.mrb[0].mxu0
    %v147 = vadd.f32 0.0, %v146
    %v148 = vpop.f32.mrb[0].mxu0
    %149 = vmatprep.mubr.f32.mxu0 0.0
    %150 = vmatmul.mubr.f32.gmra.mrb[0].mxu0 %v58
    %v151 = vpop.f32.mrb[0].mxu0
    %v152 = vadd.f32 0.0, %v151
    %v153 = vpop.f32.mrb[0].mxu0
    %154 = vmatprep.mubr.f32.mxu0 0.0
    %155 = vmatmul.mubr.f32.gmra.mrb[0].mxu0 %v61
    %v156 = vpop.f32.mrb[0].mxu0
    %v157 = vadd.f32 0.0, %v156
    %v158 = vpop.f32.mrb[0].mxu0
    %159 = vmatprep.mubr.f32.mxu0 0.0
    %160 = vmatmul.mubr.f32.gmra.mrb[0].mxu0 %v64
    %v161 = vpop.f32.mrb[0].mxu0
    %v162 = vadd.f32 0.0, %v161
    %v163 = vpop.f32.mrb[0].mxu0
    %164 = vmatprep.mubr.f32.mxu0 0.0
    %165 = vmatmul.mubr.f32.gmra.mrb[0].mxu0 %v67
    %v166 = vpop.f32.mrb[0].mxu0
    %v167 = vadd.f32 0.0, %v166
    %v168 = vpop.f32.mrb[0].mxu0
    %169 = vmatprep.mubr.f32.mxu0 0.0
    %170 = vmatmul.mubr.f32.gmra.mrb[0].mxu0 %v70
    %v171 = vpop.f32.mrb[0].mxu0
    %v172 = vadd.f32 0.0, %v171
    %v173 = vpop.f32.mrb[0].mxu0
    %174 = vmatprep.mubr.f32.mxu0 0.0
    %175 = vmatmul.mubr.f32.gmra.mrb[0].mxu0 %v73
    %v176 = vpop.f32.mrb[0].mxu0
    %v177 = vadd.f32 0.0, %v176
    %v178 = vpop.f32.mrb[0].mxu0
    %179 = vdwg.mxu0
    %v181 = vsel %vm50, %v30, 0
    %v184 = vsel %vm50, %v31, 0
    %v187 = vsel %vm50, %v32, 0
    %v190 = vsel %vm50, %v33, 0
    %v193 = vsel %vm50, %v34, 0
    %v196 = vsel %vm50, %v35, 0
    %v199 = vsel %vm50, %v36, 0
    %v202 = vsel %vm50, %v37, 0
    %204 = vmatprep.subr.mxu0 0.0
    %205 = vmatpush1.msra.mxu0 %v46
    %206 = vmatprep.subr.mxu0 0.0
    %207 = vmatpush1.msra.mxu0 %v47
    %208 = vmatprep.subr.mxu0 0.0
    %209 = vmatpush1.msra.mxu0 0.0
    %210 = vmatprep.subr.mxu0 0.0
    %211 = vmatpush1.msra.mxu0 0.0
    %212 = vmatprep.subr.mxu0 0.0
    %213 = vmatpush1.msra.mxu0 0.0
    %214 = vmatprep.subr.mxu0 0.0
    %215 = vmatpush1.msra.mxu0 0.0
    %216 = vmatprep.subr.mxu0 0.0
    %217 = vmatpush1.msra.mxu0 0.0
    %218 = vmatprep.subr.mxu0 0.0
    %219 = vmatpush1.msra.mxu0 0.0
    %220 = vmatprep.subr.mxu0 0.0
    %221 = vmatpush1.msra.mxu0 0.0
    %222 = vmatprep.subr.mxu0 0.0
    %223 = vmatpush1.msra.mxu0 0.0
    %224 = vmatprep.subr.mxu0 0.0
    %225 = vmatpush1.msra.mxu0 0.0
    %226 = vmatprep.subr.mxu0 0.0
    %227 = vmatpush1.msra.mxu0 0.0
    %228 = vmatprep.subr.mxu0 0.0
    %229 = vmatpush1.msra.mxu0 0.0
    %230 = vmatprep.subr.mxu0 0.0
    %231 = vmatpush1.msra.mxu0 0.0
    %232 = vmatprep.subr.mxu0 0.0
    %233 = vmatpush1.msra.mxu0 0.0
    %234 = vmatprep.subr.mxu0 0.0
    %235 = vmatpush1.msra.mxu0 0.0
    %236 = vmatprep.subr.mxu0 0.0
    %237 = vmatpush1.msra.mxu0 0.0
    %238 = vmatprep.subr.mxu0 0.0
    %239 = vmatpush1.msra.mxu0 0.0
    %240 = vmatprep.subr.mxu0 0.0
    %241 = vmatpush1.msra.mxu0 0.0
    %242 = vmatprep.subr.mxu0 0.0
    %243 = vmatpush1.msra.mxu0 0.0
    %244 = vmatprep.subr.mxu0 0.0
    %245 = vmatpush1.msra.mxu0 0.0
    %246 = vmatprep.subr.mxu0 0.0
    %247 = vmatpush1.msra.mxu0 0.0
    %248 = vmatprep.subr.mxu0 0.0
    %249 = vmatpush1.msra.mxu0 0.0
    %250 = vmatprep.subr.mxu0 0.0
    %251 = vmatpush1.msra.mxu0 0.0
    %252 = vmatprep.subr.mxu0 0.0
    %253 = vmatpush1.msra.mxu0 0.0
    %254 = vmatprep.subr.mxu0 0.0
    %255 = vmatpush1.msra.mxu0 0.0
    %256 = vmatprep.subr.mxu0 0.0
    %257 = vmatpush1.msra.mxu0 0.0
    %258 = vmatprep.subr.mxu0 0.0
    %259 = vmatpush1.msra.mxu0 0.0
    %260 = vmatprep.subr.mxu0 0.0
    %261 = vmatpush1.msra.mxu0 0.0
    %262 = vmatprep.subr.mxu0 0.0
    %263 = vmatpush1.msra.mxu0 0.0
    %264 = vmatprep.subr.mxu0 0.0
    %265 = vmatpush1.msra.mxu0 0.0
    %266 = vmatprep.subr.mxu0 0.0
    %267 = vmatpush1.msra.mxu0 0.0
    %268 = vmatprep.mubr.f32.mxu0 0.0
    %269 = vmatmul.mubr.f32.gmra.mrb[0].mxu0 %v181
    %v270 = vpop.f32.mrb[0].mxu0
    %v271 = vadd.f32 %v142, %v270
    %v272 = vpop.f32.mrb[0].mxu0
    %273 = vmatprep.mubr.f32.mxu0 0.0
    %274 = vmatmul.mubr.f32.gmra.mrb[0].mxu0 %v184
    %v275 = vpop.f32.mrb[0].mxu0
    %v276 = vadd.f32 %v147, %v275
    %v277 = vpop.f32.mrb[0].mxu0
    %278 = vmatprep.mubr.f32.mxu0 0.0
    %279 = vmatmul.mubr.f32.gmra.mrb[0].mxu0 %v187
    %v280 = vpop.f32.mrb[0].mxu0
    %v281 = vadd.f32 %v152, %v280
    %v282 = vpop.f32.mrb[0].mxu0
    %283 = vmatprep.mubr.f32.mxu0 0.0
    %284 = vmatmul.mubr.f32.gmra.mrb[0].mxu0 %v190
    %v285 = vpop.f32.mrb[0].mxu0
    %v286 = vadd.f32 %v157, %v285
    %v287 = vpop.f32.mrb[0].mxu0
    %288 = vmatprep.mubr.f32.mxu0 0.0
    %289 = vmatmul.mubr.f32.gmra.mrb[0].mxu0 %v193
    %v290 = vpop.f32.mrb[0].mxu0
    %v291 = vadd.f32 %v162, %v290
    %v292 = vpop.f32.mrb[0].mxu0
    %293 = vmatprep.mubr.f32.mxu0 0.0
    %294 = vmatmul.mubr.f32.gmra.mrb[0].mxu0 %v196
    %v295 = vpop.f32.mrb[0].mxu0
    %v296 = vadd.f32 %v167, %v295
    %v297 = vpop.f32.mrb[0].mxu0
    %298 = vmatprep.mubr.f32.mxu0 0.0
    %299 = vmatmul.mubr.f32.gmra.mrb[0].mxu0 %v199
    %v300 = vpop.f32.mrb[0].mxu0
    %v301 = vadd.f32 %v172, %v300
    %v302 = vpop.f32.mrb[0].mxu0
    %303 = vmatprep.mubr.f32.mxu0 0.0
    %304 = vmatmul.mubr.f32.gmra.mrb[0].mxu0 %v202
    %v305 = vpop.f32.mrb[0].mxu0
    %v306 = vadd.f32 %v177, %v305
    %v307 = vpop.f32.mrb[0].mxu0
    %308 = vdwg.mxu0
    %v309 = vlaneseq
    %v310 = vshrl.u32 %v309, 7
    %v311 = vsub.s32 0, %v310
    %v312 = vrot.slane %v28, %v311
    %v313 = vadd.f32 %v271, %v312
    %v314 = vadd.f32 %v276, %v312
    %v315 = vadd.f32 %v281, %v312
    %v316 = vadd.f32 %v286, %v312
    %v317 = vadd.f32 %v291, %v312
    %v318 = vadd.f32 %v296, %v312
    %v319 = vadd.f32 %v301, %v312
    %v320 = vadd.f32 %v306, %v312
    %321 = vadd.xlane.f32.xlu0 %v313
    %v322 = vpop.xlane.xlu0 %321
    %323 = vadd.xlane.f32.xlu0 %v314
    %v324 = vpop.xlane.xlu0 %323
    %325 = vadd.xlane.f32.xlu0 %v315
    %v326 = vpop.xlane.xlu0 %325
    %327 = vadd.xlane.f32.xlu0 %v316
    %v328 = vpop.xlane.xlu0 %327
    %329 = vadd.xlane.f32.xlu0 %v317
    %v330 = vpop.xlane.xlu0 %329
    %331 = vadd.xlane.f32.xlu0 %v318
    %v332 = vpop.xlane.xlu0 %331
    %333 = vadd.xlane.f32.xlu0 %v319
    %v334 = vpop.xlane.xlu0 %333
    %335 = vadd.xlane.f32.xlu0 %v320
    %v336 = vpop.xlane.xlu0 %335
    %v337 = vmul.f32 %v322, 0.03125
    %v338 = vmul.f32 %v324, 0.03125
    %v339 = vmul.f32 %v326, 0.03125
    %v340 = vmul.f32 %v328, 0.03125
    %v341 = vmul.f32 %v330, 0.03125
    %v342 = vmul.f32 %v332, 0.03125
    %v343 = vmul.f32 %v334, 0.03125
    %v344 = vmul.f32 %v336, 0.03125
    %v345 = vmul.f32 %v313, %v313
    %v346 = vmul.f32 %v314, %v314
    %v347 = vmul.f32 %v315, %v315
    %v348 = vmul.f32 %v316, %v316
    %v349 = vmul.f32 %v317, %v317
    %v350 = vmul.f32 %v318, %v318
    %v351 = vmul.f32 %v319, %v319
    %v352 = vmul.f32 %v320, %v320
    %353 = vadd.xlane.f32.xlu0 %v345
    %v354 = vpop.xlane.xlu0 %353
    %355 = vadd.xlane.f32.xlu0 %v346
    %v356 = vpop.xlane.xlu0 %355
    %357 = vadd.xlane.f32.xlu0 %v347
    %v358 = vpop.xlane.xlu0 %357
    %359 = vadd.xlane.f32.xlu0 %v348
    %v360 = vpop.xlane.xlu0 %359
    %361 = vadd.xlane.f32.xlu0 %v349
    %v362 = vpop.xlane.xlu0 %361
    %363 = vadd.xlane.f32.xlu0 %v350
    %v364 = vpop.xlane.xlu0 %363
    %365 = vadd.xlane.f32.xlu0 %v351
    %v366 = vpop.xlane.xlu0 %365
    %367 = vadd.xlane.f32.xlu0 %v352
    %v368 = vpop.xlane.xlu0 %367
    %v369 = vmul.f32 %v354, 0.03125
    %v370 = vmul.f32 %v356, 0.03125
    %v371 = vmul.f32 %v358, 0.03125
    %v372 = vmul.f32 %v360, 0.03125
    %v373 = vmul.f32 %v362, 0.03125
    %v374 = vmul.f32 %v364, 0.03125
    %v375 = vmul.f32 %v366, 0.03125
    %v376 = vmul.f32 %v368, 0.03125
    %v377 = vmul.f32 %v337, %v337
    %v378 = vmul.f32 %v338, %v338
    %v379 = vmul.f32 %v339, %v339
    %v380 = vmul.f32 %v340, %v340
    %v381 = vmul.f32 %v341, %v341
    %v382 = vmul.f32 %v342, %v342
    %v383 = vmul.f32 %v343, %v343
    %v384 = vmul.f32 %v344, %v344
    %v385 = vsub.f32 %v369, %v377
    %v386 = vsub.f32 %v370, %v378
    %v387 = vsub.f32 %v371, %v379
    %v388 = vsub.f32 %v372, %v380
    %v389 = vsub.f32 %v373, %v381
    %v390 = vsub.f32 %v374, %v382
    %v391 = vsub.f32 %v375, %v383
    %v392 = vsub.f32 %v376, %v384
    %v393 = vmax.f32 %v385, 0.0
    %v394 = vmax.f32 %v386, 0.0
    %v395 = vmax.f32 %v387, 0.0
    %v396 = vmax.f32 %v388, 0.0
    %v397 = vmax.f32 %v389, 0.0
    %v398 = vmax.f32 %v390, 0.0
    %v399 = vmax.f32 %v391, 0.0
    %v400 = vmax.f32 %v392, 0.0
    %v401 = vsub.f32 %v313, %v337
    %v402 = vsub.f32 %v314, %v338
    %v403 = vsub.f32 %v315, %v339
    %v404 = vsub.f32 %v316, %v340
    %v405 = vsub.f32 %v317, %v341
    %v406 = vsub.f32 %v318, %v342
    %v407 = vsub.f32 %v319, %v343
    %v408 = vsub.f32 %v320, %v344
    %v409 = vadd.f32 %v393, 1e-05
    %v410 = vadd.f32 %v394, 1e-05
    %v411 = vadd.f32 %v395, 1e-05
    %v412 = vadd.f32 %v396, 1e-05
    %v413 = vadd.f32 %v397, 1e-05
    %v414 = vadd.f32 %v398, 1e-05
    %v415 = vadd.f32 %v399, 1e-05
    %v416 = vadd.f32 %v400, 1e-05
    %v417 = vrsqrt.pop %v409
    %v418 = vrsqrt.pop %v410
    %v419 = vrsqrt.pop %v411
    %v420 = vrsqrt.pop %v412
    %v421 = vrsqrt.pop %v413
    %v422 = vrsqrt.pop %v414
    %v423 = vrsqrt.pop %v415
    %v424 = vrsqrt.pop %v416
    %v425 = vmul.f32 %v401, %v417
    %v426 = vmul.f32 %v402, %v418
    %v427 = vmul.f32 %v403, %v419
    %v428 = vmul.f32 %v404, %v420
    %v429 = vmul.f32 %v405, %v421
    %v430 = vmul.f32 %v406, %v422
    %v431 = vmul.f32 %v407, %v423
    %v432 = vmul.f32 %v408, %v424
    %v433 = vlaneseq
    %v434 = vshrl.u32 %v433, 7
    %v435 = vsub.s32 1, %v434
    %v436 = vrot.slane %v28, %v435
    %v437 = vmul.f32 %v425, %v436
    %v438 = vmul.f32 %v426, %v436
    %v439 = vmul.f32 %v427, %v436
    %v440 = vmul.f32 %v428, %v436
    %v441 = vmul.f32 %v429, %v436
    %v442 = vmul.f32 %v430, %v436
    %v443 = vmul.f32 %v431, %v436
    %v444 = vmul.f32 %v432, %v436
    %v445 = vlaneseq
    %v446 = vshrl.u32 %v445, 7
    %v447 = vsub.s32 2, %v446
    %v448 = vrot.slane %v28, %v447
    %v449 = vadd.f32 %v437, %v448
    %v450 = vadd.f32 %v438, %v448
    %v451 = vadd.f32 %v439, %v448
    %v452 = vadd.f32 %v440, %v448
    %v453 = vadd.f32 %v441, %v448
    %v454 = vadd.f32 %v442, %v448
    %v455 = vadd.f32 %v443, %v448
    %v456 = vadd.f32 %v444, %v448
    %v457 = vld [vmem:[#allocation2 + $0x20] sm:$0xff]
    %v458 = vld [vmem:[#allocation2 + $0x28] sm:$0xff]
    %v459 = vld [vmem:[#allocation2 + $0x30] sm:$0xff]
    %v460 = vld [vmem:[#allocation2 + $0x38] sm:$0xff]
    %v461 = vld [vmem:[#allocation2 + $0x40] sm:$0xff]
    %v462 = vld [vmem:[#allocation2 + $0x48] sm:$0xff]
    %v463 = vld [vmem:[#allocation2 + $0x50] sm:$0xff]
    %v464 = vld [vmem:[#allocation2 + $0x58] sm:$0xff]
    %v465 = vld [vmem:[#allocation2 + $0x60] sm:$0xff]
    %v466 = vld [vmem:[#allocation2 + $0x68] sm:$0xff]
    %v467 = vld [vmem:[#allocation2 + $0x70] sm:$0xff]
    %v468 = vld [vmem:[#allocation2 + $0x78] sm:$0xff]
    %v469 = vld [vmem:[#allocation2 + $0x80] sm:$0xff]
    %v470 = vld [vmem:[#allocation2 + $0x88] sm:$0xff]
    %v471 = vld [vmem:[#allocation2 + $0x90] sm:$0xff]
    %v472 = vld [vmem:[#allocation2 + $0x98] sm:$0xff]
    %v473 = vlaneseq
    %v474 = vshrl.u32 %v473, 7
    %v475 = vsub.s32 3, %v474
    %v476 = vrot.slane %v28, %v475
    %477 = vmatprep.subr.mxu0 0.0
    %478 = vmatpush1.msra.mxu0 %v457
    %479 = vmatprep.subr.mxu0 0.0
    %480 = vmatpush1.msra.mxu0 %v458
    %481 = vmatprep.subr.mxu0 0.0
    %482 = vmatpush1.msra.mxu0 %v459
    %483 = vmatprep.subr.mxu0 0.0
    %484 = vmatpush1.msra.mxu0 %v460
    %485 = vmatprep.subr.mxu0 0.0
    %486 = vmatpush1.msra.mxu0 %v461
    %487 = vmatprep.subr.mxu0 0.0
    %488 = vmatpush1.msra.mxu0 %v462
    %489 = vmatprep.subr.mxu0 0.0
    %490 = vmatpush1.msra.mxu0 %v463
    %491 = vmatprep.subr.mxu0 0.0
    %492 = vmatpush1.msra.mxu0 %v464
    %493 = vmatprep.subr.mxu0 0.0
    %494 = vmatpush1.msra.mxu0 %v465
    %495 = vmatprep.subr.mxu0 0.0
    %496 = vmatpush1.msra.mxu0 %v466
    %497 = vmatprep.subr.mxu0 0.0
    %498 = vmatpush1.msra.mxu0 %v467
    %499 = vmatprep.subr.mxu0 0.0
    %500 = vmatpush1.msra.mxu0 %v468
    %501 = vmatprep.subr.mxu0 0.0
    %502 = vmatpush1.msra.mxu0 %v469
    %503 = vmatprep.subr.mxu0 0.0
    %504 = vmatpush1.msra.mxu0 %v470
    %505 = vmatprep.subr.mxu0 0.0
    %506 = vmatpush1.msra.mxu0 %v471
    %507 = vmatprep.subr.mxu0 0.0
    %508 = vmatpush1.msra.mxu0 %v472
    %509 = vmatprep.subr.mxu0 0.0
    %510 = vmatpush1.msra.mxu0 0.0
    %511 = vmatprep.subr.mxu0 0.0
    %512 = vmatpush1.msra.mxu0 0.0
    %513 = vmatprep.subr.mxu0 0.0
    %514 = vmatpush1.msra.mxu0 0.0
    %515 = vmatprep.subr.mxu0 0.0
    %516 = vmatpush1.msra.mxu0 0.0
    %517 = vmatprep.subr.mxu0 0.0
    %518 = vmatpush1.msra.mxu0 0.0
    %519 = vmatprep.subr.mxu0 0.0
    %520 = vmatpush1.msra.mxu0 0.0
    %521 = vmatprep.subr.mxu0 0.0
    %522 = vmatpush1.msra.mxu0 0.0
    %523 = vmatprep.subr.mxu0 0.0
    %524 = vmatpush1.msra.mxu0 0.0
    %525 = vmatprep.subr.mxu0 0.0
    %526 = vmatpush1.msra.mxu0 0.0
    %527 = vmatprep.subr.mxu0 0.0
    %528 = vmatpush1.msra.mxu0 0.0
    %529 = vmatprep.subr.mxu0 0.0
    %530 = vmatpush1.msra.mxu0 0.0
    %531 = vmatprep.subr.mxu0 0.0
    %532 = vmatpush1.msra.mxu0 0.0
    %533 = vmatprep.subr.mxu0 0.0
    %534 = vmatpush1.msra.mxu0 0.0
    %535 = vmatprep.subr.mxu0 0.0
    %536 = vmatpush1.msra.mxu0 0.0
    %537 = vmatprep.subr.mxu0 0.0
    %538 = vmatpush1.msra.mxu0 0.0
    %539 = vmatprep.subr.mxu0 0.0
    %540 = vmatpush1.msra.mxu0 0.0
    %541 = vmatprep.mubr.f32.mxu0 0.0
    %542 = vmatmul.mubr.f32.gmra.mrb[0].mxu0 %v449
    %v543 = vpop.f32.mrb[0].mxu0
    %v544 = vadd.f32 %v476, %v543
    %v545 = vpop.f32.mrb[0].mxu0
    %546 = vmatprep.mubr.f32.mxu0 0.0
    %547 = vmatmul.mubr.f32.gmra.mrb[0].mxu0 %v450
    %v548 = vpop.f32.mrb[0].mxu0
    %v549 = vadd.f32 %v476, %v548
    %v550 = vpop.f32.mrb[0].mxu0
    %551 = vmatprep.mubr.f32.mxu0 0.0
    %552 = vmatmul.mubr.f32.gmra.mrb[0].mxu0 %v451
    %v553 = vpop.f32.mrb[0].mxu0
    %v554 = vadd.f32 %v476, %v553
    %v555 = vpop.f32.mrb[0].mxu0
    %556 = vmatprep.mubr.f32.mxu0 0.0
    %557 = vmatmul.mubr.f32.gmra.mrb[0].mxu0 %v452
    %v558 = vpop.f32.mrb[0].mxu0
    %v559 = vadd.f32 %v476, %v558
    %v560 = vpop.f32.mrb[0].mxu0
    %561 = vmatprep.mubr.f32.mxu0 0.0
    %562 = vmatmul.mubr.f32.gmra.mrb[0].mxu0 %v453
    %v563 = vpop.f32.mrb[0].mxu0
    %v564 = vadd.f32 %v476, %v563
    %v565 = vpop.f32.mrb[0].mxu0
    %566 = vmatprep.mubr.f32.mxu0 0.0
    %567 = vmatmul.mubr.f32.gmra.mrb[0].mxu0 %v454
    %v568 = vpop.f32.mrb[0].mxu0
    %v569 = vadd.f32 %v476, %v568
    %v570 = vpop.f32.mrb[0].mxu0
    %571 = vmatprep.mubr.f32.mxu0 0.0
    %572 = vmatmul.mubr.f32.gmra.mrb[0].mxu0 %v455
    %v573 = vpop.f32.mrb[0].mxu0
    %v574 = vadd.f32 %v476, %v573
    %v575 = vpop.f32.mrb[0].mxu0
    %576 = vmatprep.mubr.f32.mxu0 0.0
    %577 = vmatmul.mubr.f32.gmra.mrb[0].mxu0 %v456
    %v578 = vpop.f32.mrb[0].mxu0
    %v579 = vadd.f32 %v476, %v578
    %v580 = vpop.f32.mrb[0].mxu0
    %581 = vdwg.mxu0
    %v582 = vmax.f32 %v544, 0.0
    %v583 = vmax.f32 %v549, 0.0
    %v584 = vmax.f32 %v554, 0.0
    %v585 = vmax.f32 %v559, 0.0
    %v586 = vmax.f32 %v564, 0.0
    %v587 = vmax.f32 %v569, 0.0
    %v588 = vmax.f32 %v574, 0.0
    %v589 = vmax.f32 %v579, 0.0
    %v590 = vld [vmem:[#allocation2 + $0xa0] sm:$0xff]
    %v591 = vld [vmem:[#allocation2 + $0xa8] sm:$0xff]
    %v592 = vld [vmem:[#allocation2 + $0xb0] sm:$0xff]
    %v593 = vld [vmem:[#allocation2 + $0xb8] sm:$0xff]
    %v594 = vld [vmem:[#allocation2 + $0xc0] sm:$0xff]
    %v595 = vld [vmem:[#allocation2 + $0xc8] sm:$0xff]
    %v596 = vld [vmem:[#allocation2 + $0xd0] sm:$0xff]
    %v597 = vld [vmem:[#allocation2 + $0xd8] sm:$0xff]
    %v598 = vld [vmem:[#allocation2 + $0xe0] sm:$0xff]
    %v599 = vld [vmem:[#allocation2 + $0xe8] sm:$0xff]
    %v600 = vld [vmem:[#allocation2 + $0xf0] sm:$0xff]
    %v601 = vld [vmem:[#allocation2 + $0xf8] sm:$0xff]
    %v602 = vld [vmem:[#allocation2 + $0x100] sm:$0xff]
    %v603 = vld [vmem:[#allocation2 + $0x108] sm:$0xff]
    %v604 = vld [vmem:[#allocation2 + $0x110] sm:$0xff]
    %v605 = vld [vmem:[#allocation2 + $0x118] sm:$0xff]
    %v606 = vlaneseq
    %v607 = vshrl.u32 %v606, 7
    %v608 = vsub.s32 4, %v607
    %v609 = vrot.slane %v28, %v608
    %610 = vmatprep.subr.mxu0 0.0
    %611 = vmatpush1.msra.mxu0 %v590
    %612 = vmatprep.subr.mxu0 0.0
    %613 = vmatpush1.msra.mxu0 %v591
    %614 = vmatprep.subr.mxu0 0.0
    %615 = vmatpush1.msra.mxu0 %v592
    %616 = vmatprep.subr.mxu0 0.0
    %617 = vmatpush1.msra.mxu0 %v593
    %618 = vmatprep.subr.mxu0 0.0
    %619 = vmatpush1.msra.mxu0 %v594
    %620 = vmatprep.subr.mxu0 0.0
    %621 = vmatpush1.msra.mxu0 %v595
    %622 = vmatprep.subr.mxu0 0.0
    %623 = vmatpush1.msra.mxu0 %v596
    %624 = vmatprep.subr.mxu0 0.0
    %625 = vmatpush1.msra.mxu0 %v597
    %626 = vmatprep.subr.mxu0 0.0
    %627 = vmatpush1.msra.mxu0 %v598
    %628 = vmatprep.subr.mxu0 0.0
    %629 = vmatpush1.msra.mxu0 %v599
    %630 = vmatprep.subr.mxu0 0.0
    %631 = vmatpush1.msra.mxu0 %v600
    %632 = vmatprep.subr.mxu0 0.0
    %633 = vmatpush1.msra.mxu0 %v601
    %634 = vmatprep.subr.mxu0 0.0
    %635 = vmatpush1.msra.mxu0 %v602
    %636 = vmatprep.subr.mxu0 0.0
    %637 = vmatpush1.msra.mxu0 %v603
    %638 = vmatprep.subr.mxu0 0.0
    %639 = vmatpush1.msra.mxu0 %v604
    %640 = vmatprep.subr.mxu0 0.0
    %641 = vmatpush1.msra.mxu0 %v605
    %642 = vmatprep.subr.mxu0 0.0
    %643 = vmatpush1.msra.mxu0 0.0
    %644 = vmatprep.subr.mxu0 0.0
    %645 = vmatpush1.msra.mxu0 0.0
    %646 = vmatprep.subr.mxu0 0.0
    %647 = vmatpush1.msra.mxu0 0.0
    %648 = vmatprep.subr.mxu0 0.0
    %649 = vmatpush1.msra.mxu0 0.0
    %650 = vmatprep.subr.mxu0 0.0
    %651 = vmatpush1.msra.mxu0 0.0
    %652 = vmatprep.subr.mxu0 0.0
    %653 = vmatpush1.msra.mxu0 0.0
    %654 = vmatprep.subr.mxu0 0.0
    %655 = vmatpush1.msra.mxu0 0.0
    %656 = vmatprep.subr.mxu0 0.0
    %657 = vmatpush1.msra.mxu0 0.0
    %658 = vmatprep.subr.mxu0 0.0
    %659 = vmatpush1.msra.mxu0 0.0
    %660 = vmatprep.subr.mxu0 0.0
    %661 = vmatpush1.msra.mxu0 0.0
    %662 = vmatprep.subr.mxu0 0.0
    %663 = vmatpush1.msra.mxu0 0.0
    %664 = vmatprep.subr.mxu0 0.0
    %665 = vmatpush1.msra.mxu0 0.0
    %666 = vmatprep.subr.mxu0 0.0
    %667 = vmatpush1.msra.mxu0 0.0
    %668 = vmatprep.subr.mxu0 0.0
    %669 = vmatpush1.msra.mxu0 0.0
    %670 = vmatprep.subr.mxu0 0.0
    %671 = vmatpush1.msra.mxu0 0.0
    %672 = vmatprep.subr.mxu0 0.0
    %673 = vmatpush1.msra.mxu0 0.0
    %674 = vmatprep.mubr.f32.mxu0 0.0
    %675 = vmatmul.mubr.f32.gmra.mrb[0].mxu0 %v582
    %v676 = vpop.f32.mrb[0].mxu0
    %v677 = vadd.f32 %v609, %v676
    %v678 = vpop.f32.mrb[0].mxu0
    %679 = vmatprep.mubr.f32.mxu0 0.0
    %680 = vmatmul.mubr.f32.gmra.mrb[0].mxu0 %v583
    %v681 = vpop.f32.mrb[0].mxu0
    %v682 = vadd.f32 %v609, %v681
    %v683 = vpop.f32.mrb[0].mxu0
    %684 = vmatprep.mubr.f32.mxu0 0.0
    %685 = vmatmul.mubr.f32.gmra.mrb[0].mxu0 %v584
    %v686 = vpop.f32.mrb[0].mxu0
    %v687 = vadd.f32 %v609, %v686
    %v688 = vpop.f32.mrb[0].mxu0
    %689 = vmatprep.mubr.f32.mxu0 0.0
    %690 = vmatmul.mubr.f32.gmra.mrb[0].mxu0 %v585
    %v691 = vpop.f32.mrb[0].mxu0
    %v692 = vadd.f32 %v609, %v691
    %v693 = vpop.f32.mrb[0].mxu0
    %694 = vmatprep.mubr.f32.mxu0 0.0
    %695 = vmatmul.mubr.f32.gmra.mrb[0].mxu0 %v586
    %v696 = vpop.f32.mrb[0].mxu0
    %v697 = vadd.f32 %v609, %v696
    %v698 = vpop.f32.mrb[0].mxu0
    %699 = vmatprep.mubr.f32.mxu0 0.0
    %700 = vmatmul.mubr.f32.gmra.mrb[0].mxu0 %v587
    %v701 = vpop.f32.mrb[0].mxu0
    %v702 = vadd.f32 %v609, %v701
    %v703 = vpop.f32.mrb[0].mxu0
    %704 = vmatprep.mubr.f32.mxu0 0.0
    %705 = vmatmul.mubr.f32.gmra.mrb[0].mxu0 %v588
    %v706 = vpop.f32.mrb[0].mxu0
    %v707 = vadd.f32 %v609, %v706
    %v708 = vpop.f32.mrb[0].mxu0
    %709 = vmatprep.mubr.f32.mxu0 0.0
    %710 = vmatmul.mubr.f32.gmra.mrb[0].mxu0 %v589
    %v711 = vpop.f32.mrb[0].mxu0
    %v712 = vadd.f32 %v609, %v711
    %v713 = vpop.f32.mrb[0].mxu0
    %714 = vdwg.mxu0
    %v715 = vadd.f32 %v449, %v677
    %v716 = vadd.f32 %v450, %v682
    %v717 = vadd.f32 %v451, %v687
    %v718 = vadd.f32 %v452, %v692
    %v719 = vadd.f32 %v453, %v697
    %v720 = vadd.f32 %v454, %v702
    %v721 = vadd.f32 %v455, %v707
    %v722 = vadd.f32 %v456, %v712
    %723 = vadd.xlane.f32.xlu0 %v715
    %v724 = vpop.xlane.xlu0 %723
    %725 = vadd.xlane.f32.xlu0 %v716
    %v726 = vpop.xlane.xlu0 %725
    %727 = vadd.xlane.f32.xlu0 %v717
    %v728 = vpop.xlane.xlu0 %727
    %729 = vadd.xlane.f32.xlu0 %v718
    %v730 = vpop.xlane.xlu0 %729
    %731 = vadd.xlane.f32.xlu0 %v719
    %v732 = vpop.xlane.xlu0 %731
    %733 = vadd.xlane.f32.xlu0 %v720
    %v734 = vpop.xlane.xlu0 %733
    %735 = vadd.xlane.f32.xlu0 %v721
    %v736 = vpop.xlane.xlu0 %735
    %737 = vadd.xlane.f32.xlu0 %v722
    %v738 = vpop.xlane.xlu0 %737
    %v739 = vmul.f32 %v724, 0.03125
    %v740 = vmul.f32 %v726, 0.03125
    %v741 = vmul.f32 %v728, 0.03125
    %v742 = vmul.f32 %v730, 0.03125
    %v743 = vmul.f32 %v732, 0.03125
    %v744 = vmul.f32 %v734, 0.03125
    %v745 = vmul.f32 %v736, 0.03125
    %v746 = vmul.f32 %v738, 0.03125
    %v747 = vmul.f32 %v715, %v715
    %v748 = vmul.f32 %v716, %v716
    %v749 = vmul.f32 %v717, %v717
    %v750 = vmul.f32 %v718, %v718
    %v751 = vmul.f32 %v719, %v719
    %v752 = vmul.f32 %v720, %v720
    %v753 = vmul.f32 %v721, %v721
    %v754 = vmul.f32 %v722, %v722
    %755 = vadd.xlane.f32.xlu0 %v747
    %v756 = vpop.xlane.xlu0 %755
    %757 = vadd.xlane.f32.xlu0 %v748
    %v758 = vpop.xlane.xlu0 %757
    %759 = vadd.xlane.f32.xlu0 %v749
    %v760 = vpop.xlane.xlu0 %759
    %761 = vadd.xlane.f32.xlu0 %v750
    %v762 = vpop.xlane.xlu0 %761
    %763 = vadd.xlane.f32.xlu0 %v751
    %v764 = vpop.xlane.xlu0 %763
    %765 = vadd.xlane.f32.xlu0 %v752
    %v766 = vpop.xlane.xlu0 %765
    %767 = vadd.xlane.f32.xlu0 %v753
    %v768 = vpop.xlane.xlu0 %767
    %769 = vadd.xlane.f32.xlu0 %v754
    %v770 = vpop.xlane.xlu0 %769
    %v771 = vmul.f32 %v756, 0.03125
    %v772 = vmul.f32 %v758, 0.03125
    %v773 = vmul.f32 %v760, 0.03125
    %v774 = vmul.f32 %v762, 0.03125
    %v775 = vmul.f32 %v764, 0.03125
    %v776 = vmul.f32 %v766, 0.03125
    %v777 = vmul.f32 %v768, 0.03125
    %v778 = vmul.f32 %v770, 0.03125
    %v779 = vmul.f32 %v739, %v739
    %v780 = vmul.f32 %v740, %v740
    %v781 = vmul.f32 %v741, %v741
    %v782 = vmul.f32 %v742, %v742
    %v783 = vmul.f32 %v743, %v743
    %v784 = vmul.f32 %v744, %v744
    %v785 = vmul.f32 %v745, %v745
    %v786 = vmul.f32 %v746, %v746
    %v787 = vsub.f32 %v771, %v779
    %v788 = vsub.f32 %v772, %v780
    %v789 = vsub.f32 %v773, %v781
    %v790 = vsub.f32 %v774, %v782
    %v791 = vsub.f32 %v775, %v783
    %v792 = vsub.f32 %v776, %v784
    %v793 = vsub.f32 %v777, %v785
    %v794 = vsub.f32 %v778, %v786
    %v795 = vmax.f32 %v787, 0.0
    %v796 = vmax.f32 %v788, 0.0
    %v797 = vmax.f32 %v789, 0.0
    %v798 = vmax.f32 %v790, 0.0
    %v799 = vmax.f32 %v791, 0.0
    %v800 = vmax.f32 %v792, 0.0
    %v801 = vmax.f32 %v793, 0.0
    %v802 = vmax.f32 %v794, 0.0
    %v803 = vsub.f32 %v715, %v739
    %v804 = vsub.f32 %v716, %v740
    %v805 = vsub.f32 %v717, %v741
    %v806 = vsub.f32 %v718, %v742
    %v807 = vsub.f32 %v719, %v743
    %v808 = vsub.f32 %v720, %v744
    %v809 = vsub.f32 %v721, %v745
    %v810 = vsub.f32 %v722, %v746
    %v811 = vadd.f32 %v795, 1e-05
    %v812 = vadd.f32 %v796, 1e-05
    %v813 = vadd.f32 %v797, 1e-05
    %v814 = vadd.f32 %v798, 1e-05
    %v815 = vadd.f32 %v799, 1e-05
    %v816 = vadd.f32 %v800, 1e-05
    %v817 = vadd.f32 %v801, 1e-05
    %v818 = vadd.f32 %v802, 1e-05
    %v819 = vrsqrt.pop %v811
    %v820 = vrsqrt.pop %v812
    %v821 = vrsqrt.pop %v813
    %v822 = vrsqrt.pop %v814
    %v823 = vrsqrt.pop %v815
    %v824 = vrsqrt.pop %v816
    %v825 = vrsqrt.pop %v817
    %v826 = vrsqrt.pop %v818
    %v827 = vmul.f32 %v803, %v819
    %v828 = vmul.f32 %v804, %v820
    %v829 = vmul.f32 %v805, %v821
    %v830 = vmul.f32 %v806, %v822
    %v831 = vmul.f32 %v807, %v823
    %v832 = vmul.f32 %v808, %v824
    %v833 = vmul.f32 %v809, %v825
    %v834 = vmul.f32 %v810, %v826
    %v835 = vlaneseq
    %v836 = vshrl.u32 %v835, 7
    %v837 = vsub.s32 5, %v836
    %v838 = vrot.slane %v28, %v837
    %v839 = vmul.f32 %v827, %v838
    %v840 = vmul.f32 %v828, %v838
    %v841 = vmul.f32 %v829, %v838
    %v842 = vmul.f32 %v830, %v838
    %v843 = vmul.f32 %v831, %v838
    %v844 = vmul.f32 %v832, %v838
    %v845 = vmul.f32 %v833, %v838
    %v846 = vmul.f32 %v834, %v838
    %v847 = vlaneseq
    %v848 = vshrl.u32 %v847, 7
    %v849 = vsub.s32 6, %v848
    %v850 = vrot.slane %v28, %v849
    %v851 = vadd.f32 %v839, %v850
    %v852 = vadd.f32 %v840, %v850
    %v853 = vadd.f32 %v841, %v850
    %v854 = vadd.f32 %v842, %v850
    %v855 = vadd.f32 %v843, %v850
    %v856 = vadd.f32 %v844, %v850
    %v857 = vadd.f32 %v845, %v850
    %v858 = vadd.f32 %v846, %v850
    %v859 = vld [vmem:[#allocation2 + $0x120] sm:$0xff]
    %v860 = vld [vmem:[#allocation2 + $0x128] sm:$0xff]
    %v861 = vld [vmem:[#allocation2 + $0x130] sm:$0xff]
    %v862 = vld [vmem:[#allocation2 + $0x138] sm:$0xff]
    %v863 = vld [vmem:[#allocation2 + $0x140] sm:$0xff]
    %v864 = vld [vmem:[#allocation2 + $0x148] sm:$0xff]
    %v865 = vld [vmem:[#allocation2 + $0x150] sm:$0xff]
    %v866 = vld [vmem:[#allocation2 + $0x158] sm:$0xff]
    %v867 = vld [vmem:[#allocation2 + $0x160] sm:$0xff]
    %v868 = vld [vmem:[#allocation2 + $0x168] sm:$0xff]
    %v869 = vld [vmem:[#allocation2 + $0x170] sm:$0xff]
    %v870 = vld [vmem:[#allocation2 + $0x178] sm:$0xff]
    %v871 = vld [vmem:[#allocation2 + $0x180] sm:$0xff]
    %v872 = vld [vmem:[#allocation2 + $0x188] sm:$0xff]
    %v873 = vld [vmem:[#allocation2 + $0x190] sm:$0xff]
    %v874 = vld [vmem:[#allocation2 + $0x198] sm:$0xff]
    %v875 = vlaneseq
    %v876 = vshrl.u32 %v875, 7
    %v877 = vsub.s32 7, %v876
    %v878 = vrot.slane %v28, %v877
    %879 = vmatprep.subr.mxu0 0.0
    %880 = vmatpush1.msra.mxu0 %v859
    %881 = vmatprep.subr.mxu0 0.0
    %882 = vmatpush1.msra.mxu0 %v860
    %883 = vmatprep.subr.mxu0 0.0
    %884 = vmatpush1.msra.mxu0 %v861
    %885 = vmatprep.subr.mxu0 0.0
    %886 = vmatpush1.msra.mxu0 %v862
    %887 = vmatprep.subr.mxu0 0.0
    %888 = vmatpush1.msra.mxu0 %v863
    %889 = vmatprep.subr.mxu0 0.0
    %890 = vmatpush1.msra.mxu0 %v864
    %891 = vmatprep.subr.mxu0 0.0
    %892 = vmatpush1.msra.mxu0 %v865
    %893 = vmatprep.subr.mxu0 0.0
    %894 = vmatpush1.msra.mxu0 %v866
    %895 = vmatprep.subr.mxu0 0.0
    %896 = vmatpush1.msra.mxu0 %v867
    %897 = vmatprep.subr.mxu0 0.0
    %898 = vmatpush1.msra.mxu0 %v868
    %899 = vmatprep.subr.mxu0 0.0
    %900 = vmatpush1.msra.mxu0 %v869
    %901 = vmatprep.subr.mxu0 0.0
    %902 = vmatpush1.msra.mxu0 %v870
    %903 = vmatprep.subr.mxu0 0.0
    %904 = vmatpush1.msra.mxu0 %v871
    %905 = vmatprep.subr.mxu0 0.0
    %906 = vmatpush1.msra.mxu0 %v872
    %907 = vmatprep.subr.mxu0 0.0
    %908 = vmatpush1.msra.mxu0 %v873
    %909 = vmatprep.subr.mxu0 0.0
    %910 = vmatpush1.msra.mxu0 %v874
    %911 = vmatprep.subr.mxu0 0.0
    %912 = vmatpush1.msra.mxu0 0.0
    %913 = vmatprep.subr.mxu0 0.0
    %914 = vmatpush1.msra.mxu0 0.0
    %915 = vmatprep.subr.mxu0 0.0
    %916 = vmatpush1.msra.mxu0 0.0
    %917 = vmatprep.subr.mxu0 0.0
    %918 = vmatpush1.msra.mxu0 0.0
    %919 = vmatprep.subr.mxu0 0.0
    %920 = vmatpush1.msra.mxu0 0.0
    %921 = vmatprep.subr.mxu0 0.0
    %922 = vmatpush1.msra.mxu0 0.0
    %923 = vmatprep.subr.mxu0 0.0
    %924 = vmatpush1.msra.mxu0 0.0
    %925 = vmatprep.subr.mxu0 0.0
    %926 = vmatpush1.msra.mxu0 0.0
    %927 = vmatprep.subr.mxu0 0.0
    %928 = vmatpush1.msra.mxu0 0.0
    %929 = vmatprep.subr.mxu0 0.0
    %930 = vmatpush1.msra.mxu0 0.0
    %931 = vmatprep.subr.mxu0 0.0
    %932 = vmatpush1.msra.mxu0 0.0
    %933 = vmatprep.subr.mxu0 0.0
    %934 = vmatpush1.msra.mxu0 0.0
    %935 = vmatprep.subr.mxu0 0.0
    %936 = vmatpush1.msra.mxu0 0.0
    %937 = vmatprep.subr.mxu0 0.0
    %938 = vmatpush1.msra.mxu0 0.0
    %939 = vmatprep.subr.mxu0 0.0
    %940 = vmatpush1.msra.mxu0 0.0
    %941 = vmatprep.subr.mxu0 0.0
    %942 = vmatpush1.msra.mxu0 0.0
    %943 = vmatprep.mubr.f32.mxu0 0.0
    %944 = vmatmul.mubr.f32.gmra.mrb[0].mxu0 %v851
    %v945 = vpop.f32.mrb[0].mxu0
    %v946 = vadd.f32 %v878, %v945
    %v947 = vpop.f32.mrb[0].mxu0
    %948 = vmatprep.mubr.f32.mxu0 0.0
    %949 = vmatmul.mubr.f32.gmra.mrb[0].mxu0 %v852
    %v950 = vpop.f32.mrb[0].mxu0
    %v951 = vadd.f32 %v878, %v950
    %v952 = vpop.f32.mrb[0].mxu0
    %953 = vmatprep.mubr.f32.mxu0 0.0
    %954 = vmatmul.mubr.f32.gmra.mrb[0].mxu0 %v853
    %v955 = vpop.f32.mrb[0].mxu0
    %v956 = vadd.f32 %v878, %v955
    %v957 = vpop.f32.mrb[0].mxu0
    %958 = vmatprep.mubr.f32.mxu0 0.0
    %959 = vmatmul.mubr.f32.gmra.mrb[0].mxu0 %v854
    %v960 = vpop.f32.mrb[0].mxu0
    %v961 = vadd.f32 %v878, %v960
    %v962 = vpop.f32.mrb[0].mxu0
    %963 = vmatprep.mubr.f32.mxu0 0.0
    %964 = vmatmul.mubr.f32.gmra.mrb[0].mxu0 %v855
    %v965 = vpop.f32.mrb[0].mxu0
    %v966 = vadd.f32 %v878, %v965
    %v967 = vpop.f32.mrb[0].mxu0
    %968 = vmatprep.mubr.f32.mxu0 0.0
    %969 = vmatmul.mubr.f32.gmra.mrb[0].mxu0 %v856
    %v970 = vpop.f32.mrb[0].mxu0
    %v971 = vadd.f32 %v878, %v970
    %v972 = vpop.f32.mrb[0].mxu0
    %973 = vmatprep.mubr.f32.mxu0 0.0
    %974 = vmatmul.mubr.f32.gmra.mrb[0].mxu0 %v857
    %v975 = vpop.f32.mrb[0].mxu0
    %v976 = vadd.f32 %v878, %v975
    %v977 = vpop.f32.mrb[0].mxu0
    %978 = vmatprep.mubr.f32.mxu0 0.0
    %979 = vmatmul.mubr.f32.gmra.mrb[0].mxu0 %v858
    %v980 = vpop.f32.mrb[0].mxu0
    %v981 = vadd.f32 %v878, %v980
    %v982 = vpop.f32.mrb[0].mxu0
    %983 = vdwg.mxu0
    %v984 = vmax.f32 %v946, 0.0
    %v985 = vmax.f32 %v951, 0.0
    %v986 = vmax.f32 %v956, 0.0
    %v987 = vmax.f32 %v961, 0.0
    %v988 = vmax.f32 %v966, 0.0
    %v989 = vmax.f32 %v971, 0.0
    %v990 = vmax.f32 %v976, 0.0
    %v991 = vmax.f32 %v981, 0.0
    %v992 = vld [vmem:[#allocation2 + $0x1a0] sm:$0xff]
    %v993 = vld [vmem:[#allocation2 + $0x1a8] sm:$0xff]
    %v994 = vld [vmem:[#allocation2 + $0x1b0] sm:$0xff]
    %v995 = vld [vmem:[#allocation2 + $0x1b8] sm:$0xff]
    %v996 = vld [vmem:[#allocation2 + $0x1c0] sm:$0xff]
    %v997 = vld [vmem:[#allocation2 + $0x1c8] sm:$0xff]
    %v998 = vld [vmem:[#allocation2 + $0x1d0] sm:$0xff]
    %v999 = vld [vmem:[#allocation2 + $0x1d8] sm:$0xff]
    %v1000 = vld [vmem:[#allocation2 + $0x1e0] sm:$0xff]
    %v1001 = vld [vmem:[#allocation2 + $0x1e8] sm:$0xff]
    %v1002 = vld [vmem:[#allocation2 + $0x1f0] sm:$0xff]
    %v1003 = vld [vmem:[#allocation2 + $0x1f8] sm:$0xff]
    %v1004 = vld [vmem:[#allocation2 + $0x200] sm:$0xff]
    %v1005 = vld [vmem:[#allocation2 + $0x208] sm:$0xff]
    %v1006 = vld [vmem:[#allocation2 + $0x210] sm:$0xff]
    %v1007 = vld [vmem:[#allocation2 + $0x218] sm:$0xff]
    %v1008 = vlaneseq
    %v1009 = vshrl.u32 %v1008, 7
    %v1010 = vsub.s32 0, %v1009
    %v1011 = vrot.slane %v29, %v1010
    %1012 = vmatprep.subr.mxu0 0.0
    %1013 = vmatpush1.msra.mxu0 %v992
    %1014 = vmatprep.subr.mxu0 0.0
    %1015 = vmatpush1.msra.mxu0 %v993
    %1016 = vmatprep.subr.mxu0 0.0
    %1017 = vmatpush1.msra.mxu0 %v994
    %1018 = vmatprep.subr.mxu0 0.0
    %1019 = vmatpush1.msra.mxu0 %v995
    %1020 = vmatprep.subr.mxu0 0.0
    %1021 = vmatpush1.msra.mxu0 %v996
    %1022 = vmatprep.subr.mxu0 0.0
    %1023 = vmatpush1.msra.mxu0 %v997
    %1024 = vmatprep.subr.mxu0 0.0
    %1025 = vmatpush1.msra.mxu0 %v998
    %1026 = vmatprep.subr.mxu0 0.0
    %1027 = vmatpush1.msra.mxu0 %v999
    %1028 = vmatprep.subr.mxu0 0.0
    %1029 = vmatpush1.msra.mxu0 %v1000
    %1030 = vmatprep.subr.mxu0 0.0
    %1031 = vmatpush1.msra.mxu0 %v1001
    %1032 = vmatprep.subr.mxu0 0.0
    %1033 = vmatpush1.msra.mxu0 %v1002
    %1034 = vmatprep.subr.mxu0 0.0
    %1035 = vmatpush1.msra.mxu0 %v1003
    %1036 = vmatprep.subr.mxu0 0.0
    %1037 = vmatpush1.msra.mxu0 %v1004
    %1038 = vmatprep.subr.mxu0 0.0
    %1039 = vmatpush1.msra.mxu0 %v1005
    %1040 = vmatprep.subr.mxu0 0.0
    %1041 = vmatpush1.msra.mxu0 %v1006
    %1042 = vmatprep.subr.mxu0 0.0
    %1043 = vmatpush1.msra.mxu0 %v1007
    %1044 = vmatprep.subr.mxu0 0.0
    %1045 = vmatpush1.msra.mxu0 0.0
    %1046 = vmatprep.subr.mxu0 0.0
    %1047 = vmatpush1.msra.mxu0 0.0
    %1048 = vmatprep.subr.mxu0 0.0
    %1049 = vmatpush1.msra.mxu0 0.0
    %1050 = vmatprep.subr.mxu0 0.0
    %1051 = vmatpush1.msra.mxu0 0.0
    %1052 = vmatprep.subr.mxu0 0.0
    %1053 = vmatpush1.msra.mxu0 0.0
    %1054 = vmatprep.subr.mxu0 0.0
    %1055 = vmatpush1.msra.mxu0 0.0
    %1056 = vmatprep.subr.mxu0 0.0
    %1057 = vmatpush1.msra.mxu0 0.0
    %1058 = vmatprep.subr.mxu0 0.0
    %1059 = vmatpush1.msra.mxu0 0.0
    %1060 = vmatprep.subr.mxu0 0.0
    %1061 = vmatpush1.msra.mxu0 0.0
    %1062 = vmatprep.subr.mxu0 0.0
    %1063 = vmatpush1.msra.mxu0 0.0
    %1064 = vmatprep.subr.mxu0 0.0
    %1065 = vmatpush1.msra.mxu0 0.0
    %1066 = vmatprep.subr.mxu0 0.0
    %1067 = vmatpush1.msra.mxu0 0.0
    %1068 = vmatprep.subr.mxu0 0.0
    %1069 = vmatpush1.msra.mxu0 0.0
    %1070 = vmatprep.subr.mxu0 0.0
    %1071 = vmatpush1.msra.mxu0 0.0
    %1072 = vmatprep.subr.mxu0 0.0
    %1073 = vmatpush1.msra.mxu0 0.0
    %1074 = vmatprep.subr.mxu0 0.0
    %1075 = vmatpush1.msra.mxu0 0.0
    %1076 = vmatprep.mubr.f32.mxu0 0.0
    %1077 = vmatmul.mubr.f32.gmra.mrb[0].mxu0 %v984
    %v1078 = vpop.f32.mrb[0].mxu0
    %v1079 = vadd.f32 %v1011, %v1078
    %v1080 = vpop.f32.mrb[0].mxu0
    %1081 = vmatprep.mubr.f32.mxu0 0.0
    %1082 = vmatmul.mubr.f32.gmra.mrb[0].mxu0 %v985
    %v1083 = vpop.f32.mrb[0].mxu0
    %v1084 = vadd.f32 %v1011, %v1083
    %v1085 = vpop.f32.mrb[0].mxu0
    %1086 = vmatprep.mubr.f32.mxu0 0.0
    %1087 = vmatmul.mubr.f32.gmra.mrb[0].mxu0 %v986
    %v1088 = vpop.f32.mrb[0].mxu0
    %v1089 = vadd.f32 %v1011, %v1088
    %v1090 = vpop.f32.mrb[0].mxu0
    %1091 = vmatprep.mubr.f32.mxu0 0.0
    %1092 = vmatmul.mubr.f32.gmra.mrb[0].mxu0 %v987
    %v1093 = vpop.f32.mrb[0].mxu0
    %v1094 = vadd.f32 %v1011, %v1093
    %v1095 = vpop.f32.mrb[0].mxu0
    %1096 = vmatprep.mubr.f32.mxu0 0.0
    %1097 = vmatmul.mubr.f32.gmra.mrb[0].mxu0 %v988
    %v1098 = vpop.f32.mrb[0].mxu0
    %v1099 = vadd.f32 %v1011, %v1098
    %v1100 = vpop.f32.mrb[0].mxu0
    %1101 = vmatprep.mubr.f32.mxu0 0.0
    %1102 = vmatmul.mubr.f32.gmra.mrb[0].mxu0 %v989
    %v1103 = vpop.f32.mrb[0].mxu0
    %v1104 = vadd.f32 %v1011, %v1103
    %v1105 = vpop.f32.mrb[0].mxu0
    %1106 = vmatprep.mubr.f32.mxu0 0.0
    %1107 = vmatmul.mubr.f32.gmra.mrb[0].mxu0 %v990
    %v1108 = vpop.f32.mrb[0].mxu0
    %v1109 = vadd.f32 %v1011, %v1108
    %v1110 = vpop.f32.mrb[0].mxu0
    %1111 = vmatprep.mubr.f32.mxu0 0.0
    %1112 = vmatmul.mubr.f32.gmra.mrb[0].mxu0 %v991
    %v1113 = vpop.f32.mrb[0].mxu0
    %v1114 = vadd.f32 %v1011, %v1113
    %v1115 = vpop.f32.mrb[0].mxu0
    %1116 = vdwg.mxu0
    %v1117 = vmax.f32 %v1079, 0.0
    %v1118 = vmax.f32 %v1084, 0.0
    %v1119 = vmax.f32 %v1089, 0.0
    %v1120 = vmax.f32 %v1094, 0.0
    %v1121 = vmax.f32 %v1099, 0.0
    %v1122 = vmax.f32 %v1104, 0.0
    %v1123 = vmax.f32 %v1109, 0.0
    %v1124 = vmax.f32 %v1114, 0.0
    %v1125 = vld [vmem:[#allocation2 + $0x220] sm:$0xff]
    %v1126 = vld [vmem:[#allocation2 + $0x228] sm:$0xff]
    %v1127 = vld [vmem:[#allocation2 + $0x230] sm:$0xff]
    %v1128 = vld [vmem:[#allocation2 + $0x238] sm:$0xff]
    %v1129 = vld [vmem:[#allocation2 + $0x240] sm:$0xff]
    %v1130 = vld [vmem:[#allocation2 + $0x248] sm:$0xff]
    %v1131 = vld [vmem:[#allocation2 + $0x250] sm:$0xff]
    %v1132 = vld [vmem:[#allocation2 + $0x258] sm:$0xff]
    %v1133 = vld [vmem:[#allocation2 + $0x260] sm:$0xff]
    %v1134 = vld [vmem:[#allocation2 + $0x268] sm:$0xff]
    %v1135 = vld [vmem:[#allocation2 + $0x270] sm:$0xff]
    %v1136 = vld [vmem:[#allocation2 + $0x278] sm:$0xff]
    %v1137 = vld [vmem:[#allocation2 + $0x280] sm:$0xff]
    %v1138 = vld [vmem:[#allocation2 + $0x288] sm:$0xff]
    %v1139 = vld [vmem:[#allocation2 + $0x290] sm:$0xff]
    %v1140 = vld [vmem:[#allocation2 + $0x298] sm:$0xff]
    %v1141 = vlaneseq
    %v1142 = vshrl.u32 %v1141, 7
    %v1143 = vsub.s32 1, %v1142
    %v1144 = vrot.slane %v29, %v1143
    %1145 = vmatprep.subr.mxu0 0.0
    %1146 = vmatpush1.msra.mxu0 %v1125
    %1147 = vmatprep.subr.mxu0 0.0
    %1148 = vmatpush1.msra.mxu0 %v1126
    %1149 = vmatprep.subr.mxu0 0.0
    %1150 = vmatpush1.msra.mxu0 %v1127
    %1151 = vmatprep.subr.mxu0 0.0
    %1152 = vmatpush1.msra.mxu0 %v1128
    %1153 = vmatprep.subr.mxu0 0.0
    %1154 = vmatpush1.msra.mxu0 %v1129
    %1155 = vmatprep.subr.mxu0 0.0
    %1156 = vmatpush1.msra.mxu0 %v1130
    %1157 = vmatprep.subr.mxu0 0.0
    %1158 = vmatpush1.msra.mxu0 %v1131
    %1159 = vmatprep.subr.mxu0 0.0
    %1160 = vmatpush1.msra.mxu0 %v1132
    %1161 = vmatprep.subr.mxu0 0.0
    %1162 = vmatpush1.msra.mxu0 %v1133
    %1163 = vmatprep.subr.mxu0 0.0
    %1164 = vmatpush1.msra.mxu0 %v1134
    %1165 = vmatprep.subr.mxu0 0.0
    %1166 = vmatpush1.msra.mxu0 %v1135
    %1167 = vmatprep.subr.mxu0 0.0
    %1168 = vmatpush1.msra.mxu0 %v1136
    %1169 = vmatprep.subr.mxu0 0.0
    %1170 = vmatpush1.msra.mxu0 %v1137
    %1171 = vmatprep.subr.mxu0 0.0
    %1172 = vmatpush1.msra.mxu0 %v1138
    %1173 = vmatprep.subr.mxu0 0.0
    %1174 = vmatpush1.msra.mxu0 %v1139
    %1175 = vmatprep.subr.mxu0 0.0
    %1176 = vmatpush1.msra.mxu0 %v1140
    %1177 = vmatprep.subr.mxu0 0.0
    %1178 = vmatpush1.msra.mxu0 0.0
    %1179 = vmatprep.subr.mxu0 0.0
    %1180 = vmatpush1.msra.mxu0 0.0
    %1181 = vmatprep.subr.mxu0 0.0
    %1182 = vmatpush1.msra.mxu0 0.0
    %1183 = vmatprep.subr.mxu0 0.0
    %1184 = vmatpush1.msra.mxu0 0.0
    %1185 = vmatprep.subr.mxu0 0.0
    %1186 = vmatpush1.msra.mxu0 0.0
    %1187 = vmatprep.subr.mxu0 0.0
    %1188 = vmatpush1.msra.mxu0 0.0
    %1189 = vmatprep.subr.mxu0 0.0
    %1190 = vmatpush1.msra.mxu0 0.0
    %1191 = vmatprep.subr.mxu0 0.0
    %1192 = vmatpush1.msra.mxu0 0.0
    %1193 = vmatprep.subr.mxu0 0.0
    %1194 = vmatpush1.msra.mxu0 0.0
    %1195 = vmatprep.subr.mxu0 0.0
    %1196 = vmatpush1.msra.mxu0 0.0
    %1197 = vmatprep.subr.mxu0 0.0
    %1198 = vmatpush1.msra.mxu0 0.0
    %1199 = vmatprep.subr.mxu0 0.0
    %1200 = vmatpush1.msra.mxu0 0.0
    %1201 = vmatprep.subr.mxu0 0.0
    %1202 = vmatpush1.msra.mxu0 0.0
    %1203 = vmatprep.subr.mxu0 0.0
    %1204 = vmatpush1.msra.mxu0 0.0
    %1205 = vmatprep.subr.mxu0 0.0
    %1206 = vmatpush1.msra.mxu0 0.0
    %1207 = vmatprep.subr.mxu0 0.0
    %1208 = vmatpush1.msra.mxu0 0.0
    %1209 = vmatprep.mubr.f32.mxu0 0.0
    %1210 = vmatmul.mubr.f32.gmra.mrb[0].mxu0 %v1117
    %v1211 = vpop.f32.mrb[0].mxu0
    %v1212 = vadd.f32 %v1144, %v1211
    %v1213 = vpop.f32.mrb[0].mxu0
    %1214 = vmatprep.mubr.f32.mxu0 0.0
    %1215 = vmatmul.mubr.f32.gmra.mrb[0].mxu0 %v1118
    %v1216 = vpop.f32.mrb[0].mxu0
    %v1217 = vadd.f32 %v1144, %v1216
    %v1218 = vpop.f32.mrb[0].mxu0
    %1219 = vmatprep.mubr.f32.mxu0 0.0
    %1220 = vmatmul.mubr.f32.gmra.mrb[0].mxu0 %v1119
    %v1221 = vpop.f32.mrb[0].mxu0
    %v1222 = vadd.f32 %v1144, %v1221
    %v1223 = vpop.f32.mrb[0].mxu0
    %1224 = vmatprep.mubr.f32.mxu0 0.0
    %1225 = vmatmul.mubr.f32.gmra.mrb[0].mxu0 %v1120
    %v1226 = vpop.f32.mrb[0].mxu0
    %v1227 = vadd.f32 %v1144, %v1226
    %v1228 = vpop.f32.mrb[0].mxu0
    %1229 = vmatprep.mubr.f32.mxu0 0.0
    %1230 = vmatmul.mubr.f32.gmra.mrb[0].mxu0 %v1121
    %v1231 = vpop.f32.mrb[0].mxu0
    %v1232 = vadd.f32 %v1144, %v1231
    %v1233 = vpop.f32.mrb[0].mxu0
    %1234 = vmatprep.mubr.f32.mxu0 0.0
    %1235 = vmatmul.mubr.f32.gmra.mrb[0].mxu0 %v1122
    %v1236 = vpop.f32.mrb[0].mxu0
    %v1237 = vadd.f32 %v1144, %v1236
    %v1238 = vpop.f32.mrb[0].mxu0
    %1239 = vmatprep.mubr.f32.mxu0 0.0
    %1240 = vmatmul.mubr.f32.gmra.mrb[0].mxu0 %v1123
    %v1241 = vpop.f32.mrb[0].mxu0
    %v1242 = vadd.f32 %v1144, %v1241
    %v1243 = vpop.f32.mrb[0].mxu0
    %1244 = vmatprep.mubr.f32.mxu0 0.0
    %1245 = vmatmul.mubr.f32.gmra.mrb[0].mxu0 %v1124
    %v1246 = vpop.f32.mrb[0].mxu0
    %v1247 = vadd.f32 %v1144, %v1246
    %v1248 = vpop.f32.mrb[0].mxu0
    %1249 = vdwg.mxu0
    %1250 = vst [vmem:[%s3] sm:$0xff] %v1212
    %1251 = vst [vmem:[%s3 + $0x8] sm:$0xff] %v1217
    %1252 = vst [vmem:[%s3 + $0x10] sm:$0xff] %v1222
    %1253 = vst [vmem:[%s3 + $0x18] sm:$0xff] %v1227
    %1254 = vst [vmem:[%s3 + $0x20] sm:$0xff] %v1232
    %1255 = vst [vmem:[%s3 + $0x28] sm:$0xff] %v1237
    %1256 = vst [vmem:[%s3 + $0x30] sm:$0xff] %v1242
    %1257 = vst [vmem:[%s3 + $0x38] sm:$0xff] %v1247
    // Predicated region
    $region18: #{mft_forward.1} parent=1 // pred_check
      _
    $region19: #{mft_forward.1} parent=1 // pred_check_branch
      %1259 = sbr.rel (0) target = $region21
    $region20: #{mft_forward.1} parent=1 // pred_region
      _
    $region21: #{mft_forward.1} parent=1 // pred_fallthru
      _
    // Predicated region
    $region22: #{mft_forward.1} parent=1 // pred_check
      _
    $region23: #{mft_forward.1} parent=1 // pred_check_branch
      %1261 = sbr.rel (0) target = $region25
    $region24: #{mft_forward.1} parent=1 // pred_region
      _
    $region25: #{mft_forward.1} parent=1 // pred_fallthru
      _
    %1262 = vsyncpa [#allocation3], 1

</llo_original>
